<compile_context>
chip_gen: v7x
topology: tpu7x:2x2x1
jax: 0.10.0
libtpu: 0.0.40
codegen_flags: <defaults>
</compile_context>

<pallas_src>
import numpy as np

import jax
import jax.numpy as jnp
from jax import lax
from jax.experimental import pallas as pl
from jax.experimental.pallas import tpu as pltpu

K = 4  # all conv layers use a 4x4 kernel


# ----------------------------------------------------------------------------
# Fused encoder kernel: 4 conv layers, one grid step per batch element.
# ----------------------------------------------------------------------------
def _encoder_kernel(x_ref,
                    s1_ref, t1_ref, b1_ref,
                    s2_ref, t2_ref, b2_ref,
                    s3_ref, t3_ref, b3_ref,
                    t4_ref, b4_ref,
                    out_ref):
    def conv_relu(x_bf16, s_ref, t_ref, b_ref):
        """Strided conv + bias + ReLU on a (H, W*Cin) slab -> (OH, OW*Cout)."""
        oh = s_ref.shape[1]
        n = t_ref.shape[2]
        acc = jnp.zeros((oh, n), jnp.float32)
        for kh in range(K):                                   # static unroll
            # Row selection: stride + zero-padding folded into 0/1 matrix S.
            rows = jnp.dot(s_ref[kh], x_bf16,
                           preferred_element_type=jnp.float32)
            # Block-Toeplitz weight matmul: lane-dense N = OW*Cout.
            acc = acc + jnp.dot(rows.astype(jnp.bfloat16), t_ref[kh],
                                preferred_element_type=jnp.float32)
        acc = jnp.maximum(acc + b_ref[...], 0.0)              # fp32 bias+ReLU
        return acc.astype(jnp.bfloat16)

    def final_conv(x_bf16, t_ref, b_ref):
        """Conv2d(4nf, latent, 4, 1, 0) on a 4x4 map == full contraction."""
        latent = t_ref.shape[2]
        acc = jnp.zeros((1, latent), jnp.float32)
        for kh in range(K):
            g = jnp.dot(x_bf16, t_ref[kh],
                        preferred_element_type=jnp.float32)   # (H, latent)
            acc = acc + g[kh:kh + 1, :]                        # keep row kh
        return acc + b_ref[...]

    x = x_ref[0]                                   # (32, 32*C)   bf16
    x = conv_relu(x, s1_ref, t1_ref, b1_ref)       # (16, 16*nf)
    x = conv_relu(x, s2_ref, t2_ref, b2_ref)       # (8,  8*2nf)
    x = conv_relu(x, s3_ref, t3_ref, b3_ref)       # (4,  4*4nf)
    z = final_conv(x, t4_ref, b4_ref)              # (1, latent)  fp32
    out_ref[0] = z.astype(out_ref.dtype)


# ----------------------------------------------------------------------------
# One-time (hoisted) weight re-layout: Conv2d weight -> (S, T, bias-row).
# ----------------------------------------------------------------------------
def _build_layer_consts(w, b, H, W, stride, pad):
    w = np.asarray(w, np.float32)                  # (Cout, Cin, K, K) PyTorch
    b = np.asarray(b, np.float32)
    Cout, Cin, KH, KW = w.shape
    OH = (H + 2 * pad - KH) // stride + 1
    OW = (W + 2 * pad - KW) // stride + 1

    # S[kh, oh, h] = 1 iff input row h == stride*oh + kh - pad (zero-pad rows
    # simply become all-zero selector rows).
    S = np.zeros((KH, OH, H), np.float32)
    for kh in range(KH):
        for oh in range(OH):
            r = stride * oh + kh - pad
            if 0 <= r < H:
                S[kh, oh, r] = 1.0

    # T[kh, w*Cin+ci, ow*Cout+co] = W[co, ci, kh, kw] with kw = w-stride*ow+pad.
    T = np.zeros((KH, W * Cin, OW * Cout), np.float32)
    for kh in range(KH):
        for ow in range(OW):
            for kw in range(KW):
                wcol = stride * ow + kw - pad
                if 0 <= wcol < W:
                    T[kh, wcol * Cin:(wcol + 1) * Cin,
                      ow * Cout:(ow + 1) * Cout] = w[:, :, kh, kw].T

    brow = np.tile(b, OW).reshape(1, OW * Cout)
    return (jnp.asarray(S, jnp.bfloat16),
            jnp.asarray(T, jnp.bfloat16),
            jnp.asarray(brow, jnp.float32),
            OH, OW)


def build_encoder_consts(params, H, W):
    S1, T1, B1, H1, W1 = _build_layer_consts(params["w1"], params["b1"], H, W, 2, 1)
    S2, T2, B2, H2, W2 = _build_layer_consts(params["w2"], params["b2"], H1, W1, 2, 1)
    S3, T3, B3, H3, W3 = _build_layer_consts(params["w3"], params["b3"], H2, W2, 2, 1)
    S4, T4, B4, H4, W4 = _build_layer_consts(params["w4"], params["b4"], H3, W3, 1, 0)
    assert (H4, W4) == (1, 1), (H4, W4)
    return (S1, T1, B1, S2, T2, B2, S3, T3, B3, T4, B4)


# ----------------------------------------------------------------------------
# Forward pass: one fused pallas_call, grid over batch.
# ----------------------------------------------------------------------------
def _resident_spec(arr):
    zeros = (0,) * arr.ndim
    return pl.BlockSpec(arr.shape, lambda b: zeros)


@jax.jit
def encoder_forward(x_nchw, consts):
    B, C, H, W = x_nchw.shape
    # NCHW -> per-image row-major (H, W*C) slab; bf16 matmul operands.
    x2d = x_nchw.transpose(0, 2, 3, 1).reshape(B, H, W * C).astype(jnp.bfloat16)
    latent = consts[-1].shape[-1]

    out = pl.pallas_call(
        _encoder_kernel,
        out_shape=jax.ShapeDtypeStruct((B, 1, latent), jnp.float32),
        grid=(B,),
        in_specs=[pl.BlockSpec((1, H, W * C), lambda b: (b, 0, 0))]
                 + [_resident_spec(a) for a in consts],
        out_specs=pl.BlockSpec((1, 1, latent), lambda b: (b, 0, 0)),
        compiler_params=pltpu.CompilerParams(
            dimension_semantics=("parallel",)),
    )(x2d, *consts)
    return out.reshape(B, latent)


# ----------------------------------------------------------------------------
# Pure-JAX fp32 reference (lax.conv_general_dilated) for correctness check.
# ----------------------------------------------------------------------------
def encoder_ref(x_nchw, params):
    x = x_nchw.transpose(0, 2, 3, 1)                           # NHWC

    def conv(x, w, b, stride, pad):
        out = lax.conv_general_dilated(
            x, jnp.transpose(w, (2, 3, 1, 0)),                 # OIHW -> HWIO
            window_strides=(stride, stride),
            padding=[(pad, pad), (pad, pad)],
            dimension_numbers=("NHWC", "HWIO", "NHWC"),
            precision=lax.Precision.HIGHEST)
        return out + b

    x = jax.nn.relu(conv(x, params["w1"], params["b1"], 2, 1))
    x = jax.nn.relu(conv(x, params["w2"], params["b2"], 2, 1))
    x = jax.nn.relu(conv(x, params["w3"], params["b3"], 2, 1))
    x = conv(x, params["w4"], params["b4"], 1, 0)              # (B,1,1,latent)
    return x.reshape(x.shape[0], -1)


# ----------------------------------------------------------------------------
def init_params(key, latent_dim, channels, n_features):
    nf = n_features
    shapes = {
        "w1": (nf, channels, K, K),       "b1": (nf,),
        "w2": (nf * 2, nf, K, K),         "b2": (nf * 2,),
        "w3": (nf * 4, nf * 2, K, K),     "b3": (nf * 4,),
        "w4": (latent_dim, nf * 4, K, K), "b4": (latent_dim,),
    }
    params = {}
    for name, shape in shapes.items():
        key, sub = jax.random.split(key)
        params[name] = 0.1 * jax.random.normal(sub, shape, dtype=jnp.float32)
    return params


if __name__ == "__main__":
    # Small deterministic config: latent_dim=16, channels=3, n_features=8,
    # batch=2, 32x32 input (the architecture requires 32x32 -> 1x1).
    latent_dim, channels, n_features, batch = 16, 3, 8, 2
    H = W = 32

    key = jax.random.PRNGKey(0)
    key, kx = jax.random.split(key)
    x = jax.random.normal(kx, (batch, channels, H, W), dtype=jnp.float32)
    params = init_params(key, latent_dim, channels, n_features)

    consts = build_encoder_consts(params, H, W)   # hoisted weight re-layouts

    out = jax.block_until_ready(encoder_forward(x, consts))
    assert out.shape == (batch, latent_dim), out.shape

    ref = jax.block_until_ready(encoder_ref(x, params))
    if not jnp.allclose(out, ref, atol=5e-2, rtol=5e-2):
        raise AssertionError(
            f"mismatch vs reference: max abs err = {jnp.max(jnp.abs(out - ref))}")

    print("KERNEL_OK")
</pallas_src>

<mosaic_0001>
module attributes {stable_mosaic.version = 11 : i64} {
  func.func @_encoder_kernel(%arg0: i32, %arg1: memref<1x32x96xbf16, #tpu.memory_space<vmem>>, %arg2: memref<4x16x32xbf16, #tpu.memory_space<vmem>>, %arg3: memref<4x96x128xbf16, #tpu.memory_space<vmem>>, %arg4: memref<1x128xf32, #tpu.memory_space<vmem>>, %arg5: memref<4x8x16xbf16, #tpu.memory_space<vmem>>, %arg6: memref<4x128x128xbf16, #tpu.memory_space<vmem>>, %arg7: memref<1x128xf32, #tpu.memory_space<vmem>>, %arg8: memref<4x4x8xbf16, #tpu.memory_space<vmem>>, %arg9: memref<4x128x128xbf16, #tpu.memory_space<vmem>>, %arg10: memref<1x128xf32, #tpu.memory_space<vmem>>, %arg11: memref<4x128x16xbf16, #tpu.memory_space<vmem>>, %arg12: memref<1x16xf32, #tpu.memory_space<vmem>>, %arg13: memref<1x1x16xf32, #tpu.memory_space<vmem>>) attributes {dimension_semantics = [#tpu.dimension_semantics<parallel>], iteration_bounds = array<i64: 2>, scalar_prefetch = 0 : i64, scratch_operands = 0 : i64, tpu.core_type = #tpu.core_type<tc>, window_params = [{transform_indices = @transform_0, window_bounds = array<i64: 1, 32, 96>}, {pipeline_mode = #tpu.pipeline_mode<synchronous>, transform_indices = @transform_1, window_bounds = array<i64: 4, 16, 32>}, {pipeline_mode = #tpu.pipeline_mode<synchronous>, transform_indices = @transform_2, window_bounds = array<i64: 4, 96, 128>}, {pipeline_mode = #tpu.pipeline_mode<synchronous>, transform_indices = @transform_3, window_bounds = array<i64: 1, 128>}, {pipeline_mode = #tpu.pipeline_mode<synchronous>, transform_indices = @transform_4, window_bounds = array<i64: 4, 8, 16>}, {pipeline_mode = #tpu.pipeline_mode<synchronous>, transform_indices = @transform_5, window_bounds = array<i64: 4, 128, 128>}, {pipeline_mode = #tpu.pipeline_mode<synchronous>, transform_indices = @transform_6, window_bounds = array<i64: 1, 128>}, {pipeline_mode = #tpu.pipeline_mode<synchronous>, transform_indices = @transform_7, window_bounds = array<i64: 4, 4, 8>}, {pipeline_mode = #tpu.pipeline_mode<synchronous>, transform_indices = @transform_8, window_bounds = array<i64: 4, 128, 128>}, {pipeline_mode = #tpu.pipeline_mode<synchronous>, transform_indices = @transform_9, window_bounds = array<i64: 1, 128>}, {pipeline_mode = #tpu.pipeline_mode<synchronous>, transform_indices = @transform_10, window_bounds = array<i64: 4, 128, 16>}, {pipeline_mode = #tpu.pipeline_mode<synchronous>, transform_indices = @transform_11, window_bounds = array<i64: 1, 16>}, {transform_indices = @transform_12, window_bounds = array<i64: 1, 1, 16>}]} {
    %c0 = arith.constant 0 : index
    %c0_0 = arith.constant 0 : index
    %c0_1 = arith.constant 0 : index
    %0 = vector.load %arg1[%c0, %c0_0, %c0_1] : memref<1x32x96xbf16, #tpu.memory_space<vmem>>, vector<1x32x96xbf16>
    %1 = vector.shape_cast %0 : vector<1x32x96xbf16> to vector<32x96xbf16>
    %cst = arith.constant 0.000000e+00 : f32
    %2 = vector.broadcast %cst : f32 to vector<16x128xf32>
    %c0_2 = arith.constant 0 : index
    %c0_3 = arith.constant 0 : index
    %c0_4 = arith.constant 0 : index
    %3 = vector.load %arg2[%c0_2, %c0_3, %c0_4] : memref<4x16x32xbf16, #tpu.memory_space<vmem>>, vector<1x16x32xbf16>
    %4 = vector.shape_cast %3 : vector<1x16x32xbf16> to vector<16x32xbf16>
    %cst_5 = arith.constant dense<0.000000e+00> : vector<16x96xf32>
    %5 = tpu.matmul %4, %1, %cst_5 {dimension_numbers = #tpu.dot_dimension_numbers<[1], [0], [0], [1], [0, 0, 1, 1], [], []>} : vector<16x32xbf16>, vector<32x96xbf16>, vector<16x96xf32> -> vector<16x96xf32>
    %6 = arith.truncf %5 : vector<16x96xf32> to vector<16x96xbf16>
    %c0_6 = arith.constant 0 : index
    %c0_7 = arith.constant 0 : index
    %c0_8 = arith.constant 0 : index
    %7 = vector.load %arg3[%c0_6, %c0_7, %c0_8] : memref<4x96x128xbf16, #tpu.memory_space<vmem>>, vector<1x96x128xbf16>
    %8 = vector.shape_cast %7 : vector<1x96x128xbf16> to vector<96x128xbf16>
    %cst_9 = arith.constant dense<0.000000e+00> : vector<16x128xf32>
    %9 = tpu.matmul %6, %8, %cst_9 {dimension_numbers = #tpu.dot_dimension_numbers<[1], [0], [0], [1], [0, 0, 1, 1], [], []>} : vector<16x96xbf16>, vector<96x128xbf16>, vector<16x128xf32> -> vector<16x128xf32>
    %10 = arith.addf %2, %9 : vector<16x128xf32>
    %c1 = arith.constant 1 : index
    %c0_10 = arith.constant 0 : index
    %c0_11 = arith.constant 0 : index
    %11 = vector.load %arg2[%c1, %c0_10, %c0_11] : memref<4x16x32xbf16, #tpu.memory_space<vmem>>, vector<1x16x32xbf16>
    %12 = vector.shape_cast %11 : vector<1x16x32xbf16> to vector<16x32xbf16>
    %cst_12 = arith.constant dense<0.000000e+00> : vector<16x96xf32>
    %13 = tpu.matmul %12, %1, %cst_12 {dimension_numbers = #tpu.dot_dimension_numbers<[1], [0], [0], [1], [0, 0, 1, 1], [], []>} : vector<16x32xbf16>, vector<32x96xbf16>, vector<16x96xf32> -> vector<16x96xf32>
    %14 = arith.truncf %13 : vector<16x96xf32> to vector<16x96xbf16>
    %c1_13 = arith.constant 1 : index
    %c0_14 = arith.constant 0 : index
    %c0_15 = arith.constant 0 : index
    %15 = vector.load %arg3[%c1_13, %c0_14, %c0_15] : memref<4x96x128xbf16, #tpu.memory_space<vmem>>, vector<1x96x128xbf16>
    %16 = vector.shape_cast %15 : vector<1x96x128xbf16> to vector<96x128xbf16>
    %cst_16 = arith.constant dense<0.000000e+00> : vector<16x128xf32>
    %17 = tpu.matmul %14, %16, %cst_16 {dimension_numbers = #tpu.dot_dimension_numbers<[1], [0], [0], [1], [0, 0, 1, 1], [], []>} : vector<16x96xbf16>, vector<96x128xbf16>, vector<16x128xf32> -> vector<16x128xf32>
    %18 = arith.addf %10, %17 : vector<16x128xf32>
    %c2 = arith.constant 2 : index
    %c0_17 = arith.constant 0 : index
    %c0_18 = arith.constant 0 : index
    %19 = vector.load %arg2[%c2, %c0_17, %c0_18] : memref<4x16x32xbf16, #tpu.memory_space<vmem>>, vector<1x16x32xbf16>
    %20 = vector.shape_cast %19 : vector<1x16x32xbf16> to vector<16x32xbf16>
    %cst_19 = arith.constant dense<0.000000e+00> : vector<16x96xf32>
    %21 = tpu.matmul %20, %1, %cst_19 {dimension_numbers = #tpu.dot_dimension_numbers<[1], [0], [0], [1], [0, 0, 1, 1], [], []>} : vector<16x32xbf16>, vector<32x96xbf16>, vector<16x96xf32> -> vector<16x96xf32>
    %22 = arith.truncf %21 : vector<16x96xf32> to vector<16x96xbf16>
    %c2_20 = arith.constant 2 : index
    %c0_21 = arith.constant 0 : index
    %c0_22 = arith.constant 0 : index
    %23 = vector.load %arg3[%c2_20, %c0_21, %c0_22] : memref<4x96x128xbf16, #tpu.memory_space<vmem>>, vector<1x96x128xbf16>
    %24 = vector.shape_cast %23 : vector<1x96x128xbf16> to vector<96x128xbf16>
    %cst_23 = arith.constant dense<0.000000e+00> : vector<16x128xf32>
    %25 = tpu.matmul %22, %24, %cst_23 {dimension_numbers = #tpu.dot_dimension_numbers<[1], [0], [0], [1], [0, 0, 1, 1], [], []>} : vector<16x96xbf16>, vector<96x128xbf16>, vector<16x128xf32> -> vector<16x128xf32>
    %26 = arith.addf %18, %25 : vector<16x128xf32>
    %c3 = arith.constant 3 : index
    %c0_24 = arith.constant 0 : index
    %c0_25 = arith.constant 0 : index
    %27 = vector.load %arg2[%c3, %c0_24, %c0_25] : memref<4x16x32xbf16, #tpu.memory_space<vmem>>, vector<1x16x32xbf16>
    %28 = vector.shape_cast %27 : vector<1x16x32xbf16> to vector<16x32xbf16>
    %cst_26 = arith.constant dense<0.000000e+00> : vector<16x96xf32>
    %29 = tpu.matmul %28, %1, %cst_26 {dimension_numbers = #tpu.dot_dimension_numbers<[1], [0], [0], [1], [0, 0, 1, 1], [], []>} : vector<16x32xbf16>, vector<32x96xbf16>, vector<16x96xf32> -> vector<16x96xf32>
    %30 = arith.truncf %29 : vector<16x96xf32> to vector<16x96xbf16>
    %c3_27 = arith.constant 3 : index
    %c0_28 = arith.constant 0 : index
    %c0_29 = arith.constant 0 : index
    %31 = vector.load %arg3[%c3_27, %c0_28, %c0_29] : memref<4x96x128xbf16, #tpu.memory_space<vmem>>, vector<1x96x128xbf16>
    %32 = vector.shape_cast %31 : vector<1x96x128xbf16> to vector<96x128xbf16>
    %cst_30 = arith.constant dense<0.000000e+00> : vector<16x128xf32>
    %33 = tpu.matmul %30, %32, %cst_30 {dimension_numbers = #tpu.dot_dimension_numbers<[1], [0], [0], [1], [0, 0, 1, 1], [], []>} : vector<16x96xbf16>, vector<96x128xbf16>, vector<16x128xf32> -> vector<16x128xf32>
    %34 = arith.addf %26, %33 : vector<16x128xf32>
    %c0_31 = arith.constant 0 : index
    %c0_32 = arith.constant 0 : index
    %35 = vector.load %arg4[%c0_31, %c0_32] : memref<1x128xf32, #tpu.memory_space<vmem>>, vector<1x128xf32>
    %36 = vector.broadcast %35 : vector<1x128xf32> to vector<16x128xf32>
    %37 = arith.addf %34, %36 : vector<16x128xf32>
    %cst_33 = arith.constant 0.000000e+00 : f32
    %38 = vector.broadcast %cst_33 : f32 to vector<16x128xf32>
    %39 = arith.maximumf %37, %38 : vector<16x128xf32>
    %40 = arith.truncf %39 : vector<16x128xf32> to vector<16x128xbf16>
    %cst_34 = arith.constant 0.000000e+00 : f32
    %41 = vector.broadcast %cst_34 : f32 to vector<8x128xf32>
    %c0_35 = arith.constant 0 : index
    %c0_36 = arith.constant 0 : index
    %c0_37 = arith.constant 0 : index
    %42 = vector.load %arg5[%c0_35, %c0_36, %c0_37] : memref<4x8x16xbf16, #tpu.memory_space<vmem>>, vector<1x8x16xbf16>
    %43 = vector.shape_cast %42 : vector<1x8x16xbf16> to vector<8x16xbf16>
    %cst_38 = arith.constant dense<0.000000e+00> : vector<8x128xf32>
    %44 = tpu.matmul %43, %40, %cst_38 {dimension_numbers = #tpu.dot_dimension_numbers<[1], [0], [0], [1], [0, 0, 1, 1], [], []>} : vector<8x16xbf16>, vector<16x128xbf16>, vector<8x128xf32> -> vector<8x128xf32>
    %45 = arith.truncf %44 : vector<8x128xf32> to vector<8x128xbf16>
    %c0_39 = arith.constant 0 : index
    %c0_40 = arith.constant 0 : index
    %c0_41 = arith.constant 0 : index
    %46 = vector.load %arg6[%c0_39, %c0_40, %c0_41] : memref<4x128x128xbf16, #tpu.memory_space<vmem>>, vector<1x128x128xbf16>
    %47 = vector.shape_cast %46 : vector<1x128x128xbf16> to vector<128x128xbf16>
    %cst_42 = arith.constant dense<0.000000e+00> : vector<8x128xf32>
    %48 = tpu.matmul %45, %47, %cst_42 {dimension_numbers = #tpu.dot_dimension_numbers<[1], [0], [0], [1], [0, 0, 1, 1], [], []>} : vector<8x128xbf16>, vector<128x128xbf16>, vector<8x128xf32> -> vector<8x128xf32>
    %49 = arith.addf %41, %48 : vector<8x128xf32>
    %c1_43 = arith.constant 1 : index
    %c0_44 = arith.constant 0 : index
    %c0_45 = arith.constant 0 : index
    %50 = vector.load %arg5[%c1_43, %c0_44, %c0_45] : memref<4x8x16xbf16, #tpu.memory_space<vmem>>, vector<1x8x16xbf16>
    %51 = vector.shape_cast %50 : vector<1x8x16xbf16> to vector<8x16xbf16>
    %cst_46 = arith.constant dense<0.000000e+00> : vector<8x128xf32>
    %52 = tpu.matmul %51, %40, %cst_46 {dimension_numbers = #tpu.dot_dimension_numbers<[1], [0], [0], [1], [0, 0, 1, 1], [], []>} : vector<8x16xbf16>, vector<16x128xbf16>, vector<8x128xf32> -> vector<8x128xf32>
    %53 = arith.truncf %52 : vector<8x128xf32> to vector<8x128xbf16>
    %c1_47 = arith.constant 1 : index
    %c0_48 = arith.constant 0 : index
    %c0_49 = arith.constant 0 : index
    %54 = vector.load %arg6[%c1_47, %c0_48, %c0_49] : memref<4x128x128xbf16, #tpu.memory_space<vmem>>, vector<1x128x128xbf16>
    %55 = vector.shape_cast %54 : vector<1x128x128xbf16> to vector<128x128xbf16>
    %cst_50 = arith.constant dense<0.000000e+00> : vector<8x128xf32>
    %56 = tpu.matmul %53, %55, %cst_50 {dimension_numbers = #tpu.dot_dimension_numbers<[1], [0], [0], [1], [0, 0, 1, 1], [], []>} : vector<8x128xbf16>, vector<128x128xbf16>, vector<8x128xf32> -> vector<8x128xf32>
    %57 = arith.addf %49, %56 : vector<8x128xf32>
    %c2_51 = arith.constant 2 : index
    %c0_52 = arith.constant 0 : index
    %c0_53 = arith.constant 0 : index
    %58 = vector.load %arg5[%c2_51, %c0_52, %c0_53] : memref<4x8x16xbf16, #tpu.memory_space<vmem>>, vector<1x8x16xbf16>
    %59 = vector.shape_cast %58 : vector<1x8x16xbf16> to vector<8x16xbf16>
    %cst_54 = arith.constant dense<0.000000e+00> : vector<8x128xf32>
    %60 = tpu.matmul %59, %40, %cst_54 {dimension_numbers = #tpu.dot_dimension_numbers<[1], [0], [0], [1], [0, 0, 1, 1], [], []>} : vector<8x16xbf16>, vector<16x128xbf16>, vector<8x128xf32> -> vector<8x128xf32>
    %61 = arith.truncf %60 : vector<8x128xf32> to vector<8x128xbf16>
    %c2_55 = arith.constant 2 : index
    %c0_56 = arith.constant 0 : index
    %c0_57 = arith.constant 0 : index
    %62 = vector.load %arg6[%c2_55, %c0_56, %c0_57] : memref<4x128x128xbf16, #tpu.memory_space<vmem>>, vector<1x128x128xbf16>
    %63 = vector.shape_cast %62 : vector<1x128x128xbf16> to vector<128x128xbf16>
    %cst_58 = arith.constant dense<0.000000e+00> : vector<8x128xf32>
    %64 = tpu.matmul %61, %63, %cst_58 {dimension_numbers = #tpu.dot_dimension_numbers<[1], [0], [0], [1], [0, 0, 1, 1], [], []>} : vector<8x128xbf16>, vector<128x128xbf16>, vector<8x128xf32> -> vector<8x128xf32>
    %65 = arith.addf %57, %64 : vector<8x128xf32>
    %c3_59 = arith.constant 3 : index
    %c0_60 = arith.constant 0 : index
    %c0_61 = arith.constant 0 : index
    %66 = vector.load %arg5[%c3_59, %c0_60, %c0_61] : memref<4x8x16xbf16, #tpu.memory_space<vmem>>, vector<1x8x16xbf16>
    %67 = vector.shape_cast %66 : vector<1x8x16xbf16> to vector<8x16xbf16>
    %cst_62 = arith.constant dense<0.000000e+00> : vector<8x128xf32>
    %68 = tpu.matmul %67, %40, %cst_62 {dimension_numbers = #tpu.dot_dimension_numbers<[1], [0], [0], [1], [0, 0, 1, 1], [], []>} : vector<8x16xbf16>, vector<16x128xbf16>, vector<8x128xf32> -> vector<8x128xf32>
    %69 = arith.truncf %68 : vector<8x128xf32> to vector<8x128xbf16>
    %c3_63 = arith.constant 3 : index
    %c0_64 = arith.constant 0 : index
    %c0_65 = arith.constant 0 : index
    %70 = vector.load %arg6[%c3_63, %c0_64, %c0_65] : memref<4x128x128xbf16, #tpu.memory_space<vmem>>, vector<1x128x128xbf16>
    %71 = vector.shape_cast %70 : vector<1x128x128xbf16> to vector<128x128xbf16>
    %cst_66 = arith.constant dense<0.000000e+00> : vector<8x128xf32>
    %72 = tpu.matmul %69, %71, %cst_66 {dimension_numbers = #tpu.dot_dimension_numbers<[1], [0], [0], [1], [0, 0, 1, 1], [], []>} : vector<8x128xbf16>, vector<128x128xbf16>, vector<8x128xf32> -> vector<8x128xf32>
    %73 = arith.addf %65, %72 : vector<8x128xf32>
    %c0_67 = arith.constant 0 : index
    %c0_68 = arith.constant 0 : index
    %74 = vector.load %arg7[%c0_67, %c0_68] : memref<1x128xf32, #tpu.memory_space<vmem>>, vector<1x128xf32>
    %75 = vector.broadcast %74 : vector<1x128xf32> to vector<8x128xf32>
    %76 = arith.addf %73, %75 : vector<8x128xf32>
    %cst_69 = arith.constant 0.000000e+00 : f32
    %77 = vector.broadcast %cst_69 : f32 to vector<8x128xf32>
    %78 = arith.maximumf %76, %77 : vector<8x128xf32>
    %79 = arith.truncf %78 : vector<8x128xf32> to vector<8x128xbf16>
    %cst_70 = arith.constant 0.000000e+00 : f32
    %80 = vector.broadcast %cst_70 : f32 to vector<4x128xf32>
    %c0_71 = arith.constant 0 : index
    %c0_72 = arith.constant 0 : index
    %c0_73 = arith.constant 0 : index
    %81 = vector.load %arg8[%c0_71, %c0_72, %c0_73] : memref<4x4x8xbf16, #tpu.memory_space<vmem>>, vector<1x4x8xbf16>
    %82 = vector.shape_cast %81 : vector<1x4x8xbf16> to vector<4x8xbf16>
    %cst_74 = arith.constant dense<0.000000e+00> : vector<4x128xf32>
    %83 = tpu.matmul %82, %79, %cst_74 {dimension_numbers = #tpu.dot_dimension_numbers<[1], [0], [0], [1], [0, 0, 1, 1], [], []>} : vector<4x8xbf16>, vector<8x128xbf16>, vector<4x128xf32> -> vector<4x128xf32>
    %84 = arith.truncf %83 : vector<4x128xf32> to vector<4x128xbf16>
    %c0_75 = arith.constant 0 : index
    %c0_76 = arith.constant 0 : index
    %c0_77 = arith.constant 0 : index
    %85 = vector.load %arg9[%c0_75, %c0_76, %c0_77] : memref<4x128x128xbf16, #tpu.memory_space<vmem>>, vector<1x128x128xbf16>
    %86 = vector.shape_cast %85 : vector<1x128x128xbf16> to vector<128x128xbf16>
    %cst_78 = arith.constant dense<0.000000e+00> : vector<4x128xf32>
    %87 = tpu.matmul %84, %86, %cst_78 {dimension_numbers = #tpu.dot_dimension_numbers<[1], [0], [0], [1], [0, 0, 1, 1], [], []>} : vector<4x128xbf16>, vector<128x128xbf16>, vector<4x128xf32> -> vector<4x128xf32>
    %88 = arith.addf %80, %87 : vector<4x128xf32>
    %c1_79 = arith.constant 1 : index
    %c0_80 = arith.constant 0 : index
    %c0_81 = arith.constant 0 : index
    %89 = vector.load %arg8[%c1_79, %c0_80, %c0_81] : memref<4x4x8xbf16, #tpu.memory_space<vmem>>, vector<1x4x8xbf16>
    %90 = vector.shape_cast %89 : vector<1x4x8xbf16> to vector<4x8xbf16>
    %cst_82 = arith.constant dense<0.000000e+00> : vector<4x128xf32>
    %91 = tpu.matmul %90, %79, %cst_82 {dimension_numbers = #tpu.dot_dimension_numbers<[1], [0], [0], [1], [0, 0, 1, 1], [], []>} : vector<4x8xbf16>, vector<8x128xbf16>, vector<4x128xf32> -> vector<4x128xf32>
    %92 = arith.truncf %91 : vector<4x128xf32> to vector<4x128xbf16>
    %c1_83 = arith.constant 1 : index
    %c0_84 = arith.constant 0 : index
    %c0_85 = arith.constant 0 : index
    %93 = vector.load %arg9[%c1_83, %c0_84, %c0_85] : memref<4x128x128xbf16, #tpu.memory_space<vmem>>, vector<1x128x128xbf16>
    %94 = vector.shape_cast %93 : vector<1x128x128xbf16> to vector<128x128xbf16>
    %cst_86 = arith.constant dense<0.000000e+00> : vector<4x128xf32>
    %95 = tpu.matmul %92, %94, %cst_86 {dimension_numbers = #tpu.dot_dimension_numbers<[1], [0], [0], [1], [0, 0, 1, 1], [], []>} : vector<4x128xbf16>, vector<128x128xbf16>, vector<4x128xf32> -> vector<4x128xf32>
    %96 = arith.addf %88, %95 : vector<4x128xf32>
    %c2_87 = arith.constant 2 : index
    %c0_88 = arith.constant 0 : index
    %c0_89 = arith.constant 0 : index
    %97 = vector.load %arg8[%c2_87, %c0_88, %c0_89] : memref<4x4x8xbf16, #tpu.memory_space<vmem>>, vector<1x4x8xbf16>
    %98 = vector.shape_cast %97 : vector<1x4x8xbf16> to vector<4x8xbf16>
    %cst_90 = arith.constant dense<0.000000e+00> : vector<4x128xf32>
    %99 = tpu.matmul %98, %79, %cst_90 {dimension_numbers = #tpu.dot_dimension_numbers<[1], [0], [0], [1], [0, 0, 1, 1], [], []>} : vector<4x8xbf16>, vector<8x128xbf16>, vector<4x128xf32> -> vector<4x128xf32>
    %100 = arith.truncf %99 : vector<4x128xf32> to vector<4x128xbf16>
    %c2_91 = arith.constant 2 : index
    %c0_92 = arith.constant 0 : index
    %c0_93 = arith.constant 0 : index
    %101 = vector.load %arg9[%c2_91, %c0_92, %c0_93] : memref<4x128x128xbf16, #tpu.memory_space<vmem>>, vector<1x128x128xbf16>
    %102 = vector.shape_cast %101 : vector<1x128x128xbf16> to vector<128x128xbf16>
    %cst_94 = arith.constant dense<0.000000e+00> : vector<4x128xf32>
    %103 = tpu.matmul %100, %102, %cst_94 {dimension_numbers = #tpu.dot_dimension_numbers<[1], [0], [0], [1], [0, 0, 1, 1], [], []>} : vector<4x128xbf16>, vector<128x128xbf16>, vector<4x128xf32> -> vector<4x128xf32>
    %104 = arith.addf %96, %103 : vector<4x128xf32>
    %c3_95 = arith.constant 3 : index
    %c0_96 = arith.constant 0 : index
    %c0_97 = arith.constant 0 : index
    %105 = vector.load %arg8[%c3_95, %c0_96, %c0_97] : memref<4x4x8xbf16, #tpu.memory_space<vmem>>, vector<1x4x8xbf16>
    %106 = vector.shape_cast %105 : vector<1x4x8xbf16> to vector<4x8xbf16>
    %cst_98 = arith.constant dense<0.000000e+00> : vector<4x128xf32>
    %107 = tpu.matmul %106, %79, %cst_98 {dimension_numbers = #tpu.dot_dimension_numbers<[1], [0], [0], [1], [0, 0, 1, 1], [], []>} : vector<4x8xbf16>, vector<8x128xbf16>, vector<4x128xf32> -> vector<4x128xf32>
    %108 = arith.truncf %107 : vector<4x128xf32> to vector<4x128xbf16>
    %c3_99 = arith.constant 3 : index
    %c0_100 = arith.constant 0 : index
    %c0_101 = arith.constant 0 : index
    %109 = vector.load %arg9[%c3_99, %c0_100, %c0_101] : memref<4x128x128xbf16, #tpu.memory_space<vmem>>, vector<1x128x128xbf16>
    %110 = vector.shape_cast %109 : vector<1x128x128xbf16> to vector<128x128xbf16>
    %cst_102 = arith.constant dense<0.000000e+00> : vector<4x128xf32>
    %111 = tpu.matmul %108, %110, %cst_102 {dimension_numbers = #tpu.dot_dimension_numbers<[1], [0], [0], [1], [0, 0, 1, 1], [], []>} : vector<4x128xbf16>, vector<128x128xbf16>, vector<4x128xf32> -> vector<4x128xf32>
    %112 = arith.addf %104, %111 : vector<4x128xf32>
    %c0_103 = arith.constant 0 : index
    %c0_104 = arith.constant 0 : index
    %113 = vector.load %arg10[%c0_103, %c0_104] : memref<1x128xf32, #tpu.memory_space<vmem>>, vector<1x128xf32>
    %114 = vector.broadcast %113 : vector<1x128xf32> to vector<4x128xf32>
    %115 = arith.addf %112, %114 : vector<4x128xf32>
    %cst_105 = arith.constant 0.000000e+00 : f32
    %116 = vector.broadcast %cst_105 : f32 to vector<4x128xf32>
    %117 = arith.maximumf %115, %116 : vector<4x128xf32>
    %118 = arith.truncf %117 : vector<4x128xf32> to vector<4x128xbf16>
    %cst_106 = arith.constant 0.000000e+00 : f32
    %119 = vector.broadcast %cst_106 : f32 to vector<1x16xf32>
    %c0_107 = arith.constant 0 : index
    %c0_108 = arith.constant 0 : index
    %c0_109 = arith.constant 0 : index
    %120 = vector.load %arg11[%c0_107, %c0_108, %c0_109] : memref<4x128x16xbf16, #tpu.memory_space<vmem>>, vector<1x128x16xbf16>
    %121 = vector.shape_cast %120 : vector<1x128x16xbf16> to vector<128x16xbf16>
    %cst_110 = arith.constant dense<0.000000e+00> : vector<4x16xf32>
    %122 = tpu.matmul %118, %121, %cst_110 {dimension_numbers = #tpu.dot_dimension_numbers<[1], [0], [0], [1], [0, 0, 1, 1], [], []>} : vector<4x128xbf16>, vector<128x16xbf16>, vector<4x16xf32> -> vector<4x16xf32>
    %123 = vector.extract_strided_slice %122 {offsets = [0, 0], sizes = [1, 16], strides = [1, 1]} : vector<4x16xf32> to vector<1x16xf32>
    %124 = arith.addf %119, %123 : vector<1x16xf32>
    %c1_111 = arith.constant 1 : index
    %c0_112 = arith.constant 0 : index
    %c0_113 = arith.constant 0 : index
    %125 = vector.load %arg11[%c1_111, %c0_112, %c0_113] : memref<4x128x16xbf16, #tpu.memory_space<vmem>>, vector<1x128x16xbf16>
    %126 = vector.shape_cast %125 : vector<1x128x16xbf16> to vector<128x16xbf16>
    %cst_114 = arith.constant dense<0.000000e+00> : vector<4x16xf32>
    %127 = tpu.matmul %118, %126, %cst_114 {dimension_numbers = #tpu.dot_dimension_numbers<[1], [0], [0], [1], [0, 0, 1, 1], [], []>} : vector<4x128xbf16>, vector<128x16xbf16>, vector<4x16xf32> -> vector<4x16xf32>
    %128 = vector.extract_strided_slice %127 {offsets = [1, 0], sizes = [1, 16], strides = [1, 1]} : vector<4x16xf32> to vector<1x16xf32>
    %129 = arith.addf %124, %128 : vector<1x16xf32>
    %c2_115 = arith.constant 2 : index
    %c0_116 = arith.constant 0 : index
    %c0_117 = arith.constant 0 : index
    %130 = vector.load %arg11[%c2_115, %c0_116, %c0_117] : memref<4x128x16xbf16, #tpu.memory_space<vmem>>, vector<1x128x16xbf16>
    %131 = vector.shape_cast %130 : vector<1x128x16xbf16> to vector<128x16xbf16>
    %cst_118 = arith.constant dense<0.000000e+00> : vector<4x16xf32>
    %132 = tpu.matmul %118, %131, %cst_118 {dimension_numbers = #tpu.dot_dimension_numbers<[1], [0], [0], [1], [0, 0, 1, 1], [], []>} : vector<4x128xbf16>, vector<128x16xbf16>, vector<4x16xf32> -> vector<4x16xf32>
    %133 = vector.extract_strided_slice %132 {offsets = [2, 0], sizes = [1, 16], strides = [1, 1]} : vector<4x16xf32> to vector<1x16xf32>
    %134 = arith.addf %129, %133 : vector<1x16xf32>
    %c3_119 = arith.constant 3 : index
    %c0_120 = arith.constant 0 : index
    %c0_121 = arith.constant 0 : index
    %135 = vector.load %arg11[%c3_119, %c0_120, %c0_121] : memref<4x128x16xbf16, #tpu.memory_space<vmem>>, vector<1x128x16xbf16>
    %136 = vector.shape_cast %135 : vector<1x128x16xbf16> to vector<128x16xbf16>
    %cst_122 = arith.constant dense<0.000000e+00> : vector<4x16xf32>
    %137 = tpu.matmul %118, %136, %cst_122 {dimension_numbers = #tpu.dot_dimension_numbers<[1], [0], [0], [1], [0, 0, 1, 1], [], []>} : vector<4x128xbf16>, vector<128x16xbf16>, vector<4x16xf32> -> vector<4x16xf32>
    %138 = vector.extract_strided_slice %137 {offsets = [3, 0], sizes = [1, 16], strides = [1, 1]} : vector<4x16xf32> to vector<1x16xf32>
    %139 = arith.addf %134, %138 : vector<1x16xf32>
    %c0_123 = arith.constant 0 : index
    %c0_124 = arith.constant 0 : index
    %140 = vector.load %arg12[%c0_123, %c0_124] : memref<1x16xf32, #tpu.memory_space<vmem>>, vector<1x16xf32>
    %141 = arith.addf %139, %140 : vector<1x16xf32>
    %c0_125 = arith.constant 0 : index
    %c0_126 = arith.constant 0 : index
    %c0_127 = arith.constant 0 : index
    %142 = vector.load %arg13[%c0_125, %c0_126, %c0_127] : memref<1x1x16xf32, #tpu.memory_space<vmem>>, vector<1x1x16xf32>
    %143 = vector.shape_cast %142 : vector<1x1x16xf32> to vector<1x16xf32>
    %144 = vector.shape_cast %141 : vector<1x16xf32> to vector<1x1x16xf32>
    tpu.vector_store %arg13[%c0_125, %c0_126, %c0_127], %144 {strides = array<i32>} : memref<1x1x16xf32, #tpu.memory_space<vmem>>, vector<1x1x16xf32>,
    return
  }
  func.func @transform_0(%arg0: i32) -> (i32, i32, i32) {
    %c0_i32 = arith.constant 0 : i32
    %c0_i32_0 = arith.constant 0 : i32
    %c0_i32_1 = arith.constant 0 : i32
    return %arg0, %c0_i32, %c0_i32_0 : i32, i32, i32
  }
  func.func @transform_1(%arg0: i32) -> (i32, i32, i32) {
    %c0_i32 = arith.constant 0 : i32
    %c0_i32_0 = arith.constant 0 : i32
    %c0_i32_1 = arith.constant 0 : i32
    %c0_i32_2 = arith.constant 0 : i32
    return %c0_i32, %c0_i32_0, %c0_i32_1 : i32, i32, i32
  }
  func.func @transform_2(%arg0: i32) -> (i32, i32, i32) {
    %c0_i32 = arith.constant 0 : i32
    %c0_i32_0 = arith.constant 0 : i32
    %c0_i32_1 = arith.constant 0 : i32
    %c0_i32_2 = arith.constant 0 : i32
    return %c0_i32, %c0_i32_0, %c0_i32_1 : i32, i32, i32
  }
  func.func @transform_3(%arg0: i32) -> (i32, i32) {
    %c0_i32 = arith.constant 0 : i32
    %c0_i32_0 = arith.constant 0 : i32
    %c0_i32_1 = arith.constant 0 : i32
    return %c0_i32, %c0_i32_0 : i32, i32
  }
  func.func @transform_4(%arg0: i32) -> (i32, i32, i32) {
    %c0_i32 = arith.constant 0 : i32
    %c0_i32_0 = arith.constant 0 : i32
    %c0_i32_1 = arith.constant 0 : i32
    %c0_i32_2 = arith.constant 0 : i32
    return %c0_i32, %c0_i32_0, %c0_i32_1 : i32, i32, i32
  }
  func.func @transform_5(%arg0: i32) -> (i32, i32, i32) {
    %c0_i32 = arith.constant 0 : i32
    %c0_i32_0 = arith.constant 0 : i32
    %c0_i32_1 = arith.constant 0 : i32
    %c0_i32_2 = arith.constant 0 : i32
    return %c0_i32, %c0_i32_0, %c0_i32_1 : i32, i32, i32
  }
  func.func @transform_6(%arg0: i32) -> (i32, i32) {
    %c0_i32 = arith.constant 0 : i32
    %c0_i32_0 = arith.constant 0 : i32
    %c0_i32_1 = arith.constant 0 : i32
    return %c0_i32, %c0_i32_0 : i32, i32
  }
  func.func @transform_7(%arg0: i32) -> (i32, i32, i32) {
    %c0_i32 = arith.constant 0 : i32
    %c0_i32_0 = arith.constant 0 : i32
    %c0_i32_1 = arith.constant 0 : i32
    %c0_i32_2 = arith.constant 0 : i32
    return %c0_i32, %c0_i32_0, %c0_i32_1 : i32, i32, i32
  }
  func.func @transform_8(%arg0: i32) -> (i32, i32, i32) {
    %c0_i32 = arith.constant 0 : i32
    %c0_i32_0 = arith.constant 0 : i32
    %c0_i32_1 = arith.constant 0 : i32
    %c0_i32_2 = arith.constant 0 : i32
    return %c0_i32, %c0_i32_0, %c0_i32_1 : i32, i32, i32
  }
  func.func @transform_9(%arg0: i32) -> (i32, i32) {
    %c0_i32 = arith.constant 0 : i32
    %c0_i32_0 = arith.constant 0 : i32
    %c0_i32_1 = arith.constant 0 : i32
    return %c0_i32, %c0_i32_0 : i32, i32
  }
  func.func @transform_10(%arg0: i32) -> (i32, i32, i32) {
    %c0_i32 = arith.constant 0 : i32
    %c0_i32_0 = arith.constant 0 : i32
    %c0_i32_1 = arith.constant 0 : i32
    %c0_i32_2 = arith.constant 0 : i32
    return %c0_i32, %c0_i32_0, %c0_i32_1 : i32, i32, i32
  }
  func.func @transform_11(%arg0: i32) -> (i32, i32) {
    %c0_i32 = arith.constant 0 : i32
    %c0_i32_0 = arith.constant 0 : i32
    %c0_i32_1 = arith.constant 0 : i32
    return %c0_i32, %c0_i32_0 : i32, i32
  }
  func.func @transform_12(%arg0: i32) -> (i32, i32, i32) {
    %c0_i32 = arith.constant 0 : i32
    %c0_i32_0 = arith.constant 0 : i32
    %c0_i32_1 = arith.constant 0 : i32
    return %arg0, %c0_i32, %c0_i32_0 : i32, i32, i32
  }
}

</mosaic_0001>

<llo_original>
// kernel: encoder_forward.1
$region0: #{encoder_forward.1}
  #allocation0 [shape = 'u32[]', space=smem, size = 0x4, offset = 0x4, fixed_abs, tag = 'smem constant byte address 0x4 - core index']
  #allocation1 [shape = 'u32[144,128]{1,0:T(1,128)}', space=vmem, size = 0x12000, scoped, tag = 'internal scratch']
  %s0 = inlined_call_operand.vmem [shape: bf16[2,32,96], index: 0, kind: input, shape index: {}]
  %s1 = inlined_call_operand.vmem [shape: bf16[4,16,32], index: 1, kind: input, shape index: {}]
  %s2 = inlined_call_operand.vmem [shape: bf16[4,96,128], index: 2, kind: input, shape index: {}]
  %s3 = inlined_call_operand.vmem [shape: f32[1,128], index: 3, kind: input, shape index: {}]
  %s4 = inlined_call_operand.vmem [shape: bf16[4,8,16], index: 4, kind: input, shape index: {}]
  %s5 = inlined_call_operand.vmem [shape: bf16[4,128,128], index: 5, kind: input, shape index: {}]
  %s6 = inlined_call_operand.vmem [shape: f32[1,128], index: 6, kind: input, shape index: {}]
  %s7 = inlined_call_operand.vmem [shape: bf16[4,4,8], index: 7, kind: input, shape index: {}]
  %s8 = inlined_call_operand.vmem [shape: bf16[4,128,128], index: 8, kind: input, shape index: {}]
  %s9 = inlined_call_operand.vmem [shape: f32[1,128], index: 9, kind: input, shape index: {}]
  %s10 = inlined_call_operand.vmem [shape: bf16[4,128,16], index: 10, kind: input, shape index: {}]
  %s11 = inlined_call_operand.vmem [shape: f32[1,16], index: 11, kind: input, shape index: {}]
  %s12 = inlined_call_operand.hbm [shape: f32[2,1,16], index: 12, kind: output, shape index: {}]
  %s13 = sld [smem:[#allocation0]]
  $region81: #{encoder_forward.1} parent=0
    _
  %s15 = ssub.s32 1, %s13
  %s16 = scalar_select 0, %s15, %s13
  $region1: #{encoder_forward.1} parent=0
    #allocation2 [shape = 'u8[1024]{0}', space=vmem, size = 0x400, scoped, tag = 'output window, operand 0']
    #allocation3 [shape = 's32[2]{0}', space=sflag, size = 0x8, scoped, tag = 'scoped memory for encoder_forward.1']
    %17 = vsyncpa [#allocation3], 0
    %s18 = scalar_lea.sflag [#allocation3], 1
    %19 = vsyncpa %s18, 0
    loop: start=0, step=1, limit=4
    $region2: #{encoder_forward.1} parent=1 // loop_pre_header
      _
    $region3: #{encoder_forward.1} parent=1 // loop_header
      %s21 = sphi 0, %s25
      %p22 = scmp.ge.s32.totalorder %s21, 4
      %s31 = sphi 0, %s33
      %s34 = sphi 0, %s31
      %s35 = sphi 0, %s34
      %s51 = sphi 0, %s35
      %s55 = sphi 0, %s55
      %s57 = sphi 0, %s55
      %s58 = sphi 0, %s57
      %s72 = sphi 0, %s58
      %s76 = sphi 0, %s76
      %s78 = sphi 0, %s76
      %s79 = sphi 0, %s78
      %s93 = sphi 0, %s79
      %s97 = sphi 0, %s97
      %s99 = sphi 0, %s97
      %s100 = sphi 0, %s99
      %s114 = sphi 0, %s100
      %s118 = sphi 0, %s118
      %s120 = sphi 0, %s118
      %s121 = sphi 0, %s120
      %s135 = sphi 0, %s121
      %s139 = sphi 0, %s139
      %s141 = sphi 0, %s139
      %s142 = sphi 0, %s141
      %s156 = sphi 0, %s142
      %s160 = sphi 0, %s160
      %s162 = sphi 0, %s160
      %s163 = sphi 0, %s162
      %s177 = sphi 0, %s163
      %s181 = sphi 0, %s181
      %s183 = sphi 0, %s181
      %s184 = sphi 0, %s183
      %s198 = sphi 0, %s184
      %s202 = sphi 0, %s202
      %s204 = sphi 0, %s202
      %s205 = sphi 0, %s204
      %s219 = sphi 0, %s205
      %s223 = sphi 0, %s223
      %s225 = sphi 0, %s223
      %s226 = sphi 0, %s225
      %s240 = sphi 0, %s226
      %s244 = sphi 0, %s244
      %s246 = sphi 0, %s244
      %s247 = sphi 0, %s246
      %s261 = sphi 0, %s247
      %s265 = sphi 0, %s265
      %s267 = sphi 0, %s265
      %s268 = sphi 0, %s267
      %s282 = sphi 0, %s268
      %s288 = sphi 0, %s290
      %s291 = sphi 0, %s288
      %s292 = sphi 0, %s291
      %s308 = sphi 0, %s292
    $region4: #{encoder_forward.1} parent=1 // loop_header_branch
      %24 = sbr.rel (%p22) target = $region8
    $region5: #{encoder_forward.1} parent=1 // loop_body
      %s26 = ssub.s32 %s21, 1
      %s27 = ssub.s32 %s21, 2
      %s28 = sadd.s32 %s21, 1
      %s29 = ssub.s32 %s21, %s28
      %p30 = scmp.eq.s32.totalorder %s29, 0
      %s32 = sadd.s32 %s31, 1
      %s33 = scalar_select %p30, %s31, %s32
      %p36 = pneg %p30
      %p37 = scmp.eq.s32.totalorder %s21, 1
      %p38 = por %p36, %p37
      %p39 = scmp.ne.s32.totalorder %s31, %s34
      %p40 = scmp.eq.s32.totalorder %s21, 0
      %p41 = por %p39, %p40
      %p42 = scmp.ne.s32.totalorder %s31, %s34
      %p43 = scmp.eq.s32.totalorder %s26, 1
      %p44 = por %p42, %p43
      %p45 = scmp.ne.s32.totalorder %s34, %s35
      %p46 = scmp.eq.s32.totalorder %s26, 0
      %p47 = por %p45, %p46
      %p48 = scmp.ne.s32.totalorder %s34, %s35
      %p49 = scmp.eq.s32.totalorder %s27, 1
      %p50 = por %p48, %p49
      %p52 = scmp.ne.s32.totalorder %s35, %s51
      %p53 = scmp.eq.s32.totalorder %s27, 0
      %p54 = por %p52, %p53
      %s56 = sadd.s32 %s55, 1
      %p59 = scmp.eq.s32.totalorder %s21, 1
      %p60 = scmp.ne.s32.totalorder %s55, %s57
      %p61 = scmp.eq.s32.totalorder %s21, 0
      %p62 = por %p60, %p61
      %p63 = scmp.ne.s32.totalorder %s55, %s57
      %p64 = scmp.eq.s32.totalorder %s26, 1
      %p65 = por %p63, %p64
      %p66 = scmp.ne.s32.totalorder %s57, %s58
      %p67 = scmp.eq.s32.totalorder %s26, 0
      %p68 = por %p66, %p67
      %p69 = scmp.ne.s32.totalorder %s57, %s58
      %p70 = scmp.eq.s32.totalorder %s27, 1
      %p71 = por %p69, %p70
      %p73 = scmp.ne.s32.totalorder %s58, %s72
      %p74 = scmp.eq.s32.totalorder %s27, 0
      %p75 = por %p73, %p74
      %s77 = sadd.s32 %s76, 1
      %p80 = scmp.eq.s32.totalorder %s21, 1
      %p81 = scmp.ne.s32.totalorder %s76, %s78
      %p82 = scmp.eq.s32.totalorder %s21, 0
      %p83 = por %p81, %p82
      %p84 = scmp.ne.s32.totalorder %s76, %s78
      %p85 = scmp.eq.s32.totalorder %s26, 1
      %p86 = por %p84, %p85
      %p87 = scmp.ne.s32.totalorder %s78, %s79
      %p88 = scmp.eq.s32.totalorder %s26, 0
      %p89 = por %p87, %p88
      %p90 = scmp.ne.s32.totalorder %s78, %s79
      %p91 = scmp.eq.s32.totalorder %s27, 1
      %p92 = por %p90, %p91
      %p94 = scmp.ne.s32.totalorder %s79, %s93
      %p95 = scmp.eq.s32.totalorder %s27, 0
      %p96 = por %p94, %p95
      %s98 = sadd.s32 %s97, 1
      %p101 = scmp.eq.s32.totalorder %s21, 1
      %p102 = scmp.ne.s32.totalorder %s97, %s99
      %p103 = scmp.eq.s32.totalorder %s21, 0
      %p104 = por %p102, %p103
      %p105 = scmp.ne.s32.totalorder %s97, %s99
      %p106 = scmp.eq.s32.totalorder %s26, 1
      %p107 = por %p105, %p106
      %p108 = scmp.ne.s32.totalorder %s99, %s100
      %p109 = scmp.eq.s32.totalorder %s26, 0
      %p110 = por %p108, %p109
      %p111 = scmp.ne.s32.totalorder %s99, %s100
      %p112 = scmp.eq.s32.totalorder %s27, 1
      %p113 = por %p111, %p112
      %p115 = scmp.ne.s32.totalorder %s100, %s114
      %p116 = scmp.eq.s32.totalorder %s27, 0
      %p117 = por %p115, %p116
      %s119 = sadd.s32 %s118, 1
      %p122 = scmp.eq.s32.totalorder %s21, 1
      %p123 = scmp.ne.s32.totalorder %s118, %s120
      %p124 = scmp.eq.s32.totalorder %s21, 0
      %p125 = por %p123, %p124
      %p126 = scmp.ne.s32.totalorder %s118, %s120
      %p127 = scmp.eq.s32.totalorder %s26, 1
      %p128 = por %p126, %p127
      %p129 = scmp.ne.s32.totalorder %s120, %s121
      %p130 = scmp.eq.s32.totalorder %s26, 0
      %p131 = por %p129, %p130
      %p132 = scmp.ne.s32.totalorder %s120, %s121
      %p133 = scmp.eq.s32.totalorder %s27, 1
      %p134 = por %p132, %p133
      %p136 = scmp.ne.s32.totalorder %s121, %s135
      %p137 = scmp.eq.s32.totalorder %s27, 0
      %p138 = por %p136, %p137
      %s140 = sadd.s32 %s139, 1
      %p143 = scmp.eq.s32.totalorder %s21, 1
      %p144 = scmp.ne.s32.totalorder %s139, %s141
      %p145 = scmp.eq.s32.totalorder %s21, 0
      %p146 = por %p144, %p145
      %p147 = scmp.ne.s32.totalorder %s139, %s141
      %p148 = scmp.eq.s32.totalorder %s26, 1
      %p149 = por %p147, %p148
      %p150 = scmp.ne.s32.totalorder %s141, %s142
      %p151 = scmp.eq.s32.totalorder %s26, 0
      %p152 = por %p150, %p151
      %p153 = scmp.ne.s32.totalorder %s141, %s142
      %p154 = scmp.eq.s32.totalorder %s27, 1
      %p155 = por %p153, %p154
      %p157 = scmp.ne.s32.totalorder %s142, %s156
      %p158 = scmp.eq.s32.totalorder %s27, 0
      %p159 = por %p157, %p158
      %s161 = sadd.s32 %s160, 1
      %p164 = scmp.eq.s32.totalorder %s21, 1
      %p165 = scmp.ne.s32.totalorder %s160, %s162
      %p166 = scmp.eq.s32.totalorder %s21, 0
      %p167 = por %p165, %p166
      %p168 = scmp.ne.s32.totalorder %s160, %s162
      %p169 = scmp.eq.s32.totalorder %s26, 1
      %p170 = por %p168, %p169
      %p171 = scmp.ne.s32.totalorder %s162, %s163
      %p172 = scmp.eq.s32.totalorder %s26, 0
      %p173 = por %p171, %p172
      %p174 = scmp.ne.s32.totalorder %s162, %s163
      %p175 = scmp.eq.s32.totalorder %s27, 1
      %p176 = por %p174, %p175
      %p178 = scmp.ne.s32.totalorder %s163, %s177
      %p179 = scmp.eq.s32.totalorder %s27, 0
      %p180 = por %p178, %p179
      %s182 = sadd.s32 %s181, 1
      %p185 = scmp.eq.s32.totalorder %s21, 1
      %p186 = scmp.ne.s32.totalorder %s181, %s183
      %p187 = scmp.eq.s32.totalorder %s21, 0
      %p188 = por %p186, %p187
      %p189 = scmp.ne.s32.totalorder %s181, %s183
      %p190 = scmp.eq.s32.totalorder %s26, 1
      %p191 = por %p189, %p190
      %p192 = scmp.ne.s32.totalorder %s183, %s184
      %p193 = scmp.eq.s32.totalorder %s26, 0
      %p194 = por %p192, %p193
      %p195 = scmp.ne.s32.totalorder %s183, %s184
      %p196 = scmp.eq.s32.totalorder %s27, 1
      %p197 = por %p195, %p196
      %p199 = scmp.ne.s32.totalorder %s184, %s198
      %p200 = scmp.eq.s32.totalorder %s27, 0
      %p201 = por %p199, %p200
      %s203 = sadd.s32 %s202, 1
      %p206 = scmp.eq.s32.totalorder %s21, 1
      %p207 = scmp.ne.s32.totalorder %s202, %s204
      %p208 = scmp.eq.s32.totalorder %s21, 0
      %p209 = por %p207, %p208
      %p210 = scmp.ne.s32.totalorder %s202, %s204
      %p211 = scmp.eq.s32.totalorder %s26, 1
      %p212 = por %p210, %p211
      %p213 = scmp.ne.s32.totalorder %s204, %s205
      %p214 = scmp.eq.s32.totalorder %s26, 0
      %p215 = por %p213, %p214
      %p216 = scmp.ne.s32.totalorder %s204, %s205
      %p217 = scmp.eq.s32.totalorder %s27, 1
      %p218 = por %p216, %p217
      %p220 = scmp.ne.s32.totalorder %s205, %s219
      %p221 = scmp.eq.s32.totalorder %s27, 0
      %p222 = por %p220, %p221
      %s224 = sadd.s32 %s223, 1
      %p227 = scmp.eq.s32.totalorder %s21, 1
      %p228 = scmp.ne.s32.totalorder %s223, %s225
      %p229 = scmp.eq.s32.totalorder %s21, 0
      %p230 = por %p228, %p229
      %p231 = scmp.ne.s32.totalorder %s223, %s225
      %p232 = scmp.eq.s32.totalorder %s26, 1
      %p233 = por %p231, %p232
      %p234 = scmp.ne.s32.totalorder %s225, %s226
      %p235 = scmp.eq.s32.totalorder %s26, 0
      %p236 = por %p234, %p235
      %p237 = scmp.ne.s32.totalorder %s225, %s226
      %p238 = scmp.eq.s32.totalorder %s27, 1
      %p239 = por %p237, %p238
      %p241 = scmp.ne.s32.totalorder %s226, %s240
      %p242 = scmp.eq.s32.totalorder %s27, 0
      %p243 = por %p241, %p242
      %s245 = sadd.s32 %s244, 1
      %p248 = scmp.eq.s32.totalorder %s21, 1
      %p249 = scmp.ne.s32.totalorder %s244, %s246
      %p250 = scmp.eq.s32.totalorder %s21, 0
      %p251 = por %p249, %p250
      %p252 = scmp.ne.s32.totalorder %s244, %s246
      %p253 = scmp.eq.s32.totalorder %s26, 1
      %p254 = por %p252, %p253
      %p255 = scmp.ne.s32.totalorder %s246, %s247
      %p256 = scmp.eq.s32.totalorder %s26, 0
      %p257 = por %p255, %p256
      %p258 = scmp.ne.s32.totalorder %s246, %s247
      %p259 = scmp.eq.s32.totalorder %s27, 1
      %p260 = por %p258, %p259
      %p262 = scmp.ne.s32.totalorder %s247, %s261
      %p263 = scmp.eq.s32.totalorder %s27, 0
      %p264 = por %p262, %p263
      %s266 = sadd.s32 %s265, 1
      %p269 = scmp.eq.s32.totalorder %s21, 1
      %p270 = scmp.ne.s32.totalorder %s265, %s267
      %p271 = scmp.eq.s32.totalorder %s21, 0
      %p272 = por %p270, %p271
      %p273 = scmp.ne.s32.totalorder %s265, %s267
      %p274 = scmp.eq.s32.totalorder %s26, 1
      %p275 = por %p273, %p274
      %p276 = scmp.ne.s32.totalorder %s267, %s268
      %p277 = scmp.eq.s32.totalorder %s26, 0
      %p278 = por %p276, %p277
      %p279 = scmp.ne.s32.totalorder %s267, %s268
      %p280 = scmp.eq.s32.totalorder %s27, 1
      %p281 = por %p279, %p280
      %p283 = scmp.ne.s32.totalorder %s268, %s282
      %p284 = scmp.eq.s32.totalorder %s27, 0
      %p285 = por %p283, %p284
      %s286 = ssub.s32 %s21, %s28
      %p287 = scmp.eq.s32.totalorder %s286, 0
      %s289 = sadd.s32 %s288, 1
      %s290 = scalar_select %p287, %s288, %s289
      %p293 = pneg %p287
      %p294 = scmp.eq.s32.totalorder %s21, 1
      %p295 = por %p293, %p294
      %p296 = scmp.ne.s32.totalorder %s288, %s291
      %p297 = scmp.eq.s32.totalorder %s21, 0
      %p298 = por %p296, %p297
      %p299 = scmp.ne.s32.totalorder %s288, %s291
      %p300 = scmp.eq.s32.totalorder %s26, 1
      %p301 = por %p299, %p300
      %p302 = scmp.ne.s32.totalorder %s291, %s292
      %p303 = scmp.eq.s32.totalorder %s26, 0
      %p304 = por %p302, %p303
      %p305 = scmp.ne.s32.totalorder %s291, %s292
      %p306 = scmp.eq.s32.totalorder %s27, 1
      %p307 = por %p305, %p306
      %p309 = scmp.ne.s32.totalorder %s292, %s308
      %p310 = scmp.eq.s32.totalorder %s27, 0
      %p311 = por %p309, %p310
      %p312 = scmp.le.s32.totalorder 1, %s21
      %p313 = scmp.lt.s32.totalorder %s21, 3
      %p314 = pnand %p312, %p313
      %p315 = pneg %p314
      // Predicated region
      $region9: #{encoder_forward.1} parent=5 // pred_check
        _
      $region10: #{encoder_forward.1} parent=5 // pred_check_branch
        %317 = sbr.rel (%p314) target = $region12
      $region11: #{encoder_forward.1} parent=5 // pred_region
        %s318 = ssub.s32 %s21, 1
        // Predicated region
        $region13: #{encoder_forward.1} parent=11 // pred_check
          %p319 = pneg %p68
        $region14: #{encoder_forward.1} parent=11 // pred_check_branch
          %321 = sbr.rel (%p319) target = $region16
        $region15: #{encoder_forward.1} parent=11 // pred_region
          _
        $region16: #{encoder_forward.1} parent=11 // pred_fallthru
          _
        // Predicated region
        $region17: #{encoder_forward.1} parent=11 // pred_check
          %p322 = pneg %p89
        $region18: #{encoder_forward.1} parent=11 // pred_check_branch
          %324 = sbr.rel (%p322) target = $region20
        $region19: #{encoder_forward.1} parent=11 // pred_region
          _
        $region20: #{encoder_forward.1} parent=11 // pred_fallthru
          _
        // Predicated region
        $region21: #{encoder_forward.1} parent=11 // pred_check
          %p325 = pneg %p110
        $region22: #{encoder_forward.1} parent=11 // pred_check_branch
          %327 = sbr.rel (%p325) target = $region24
        $region23: #{encoder_forward.1} parent=11 // pred_region
          _
        $region24: #{encoder_forward.1} parent=11 // pred_fallthru
          _
        // Predicated region
        $region25: #{encoder_forward.1} parent=11 // pred_check
          %p328 = pneg %p131
        $region26: #{encoder_forward.1} parent=11 // pred_check_branch
          %330 = sbr.rel (%p328) target = $region28
        $region27: #{encoder_forward.1} parent=11 // pred_region
          _
        $region28: #{encoder_forward.1} parent=11 // pred_fallthru
          _
        // Predicated region
        $region29: #{encoder_forward.1} parent=11 // pred_check
          %p331 = pneg %p152
        $region30: #{encoder_forward.1} parent=11 // pred_check_branch
          %333 = sbr.rel (%p331) target = $region32
        $region31: #{encoder_forward.1} parent=11 // pred_region
          _
        $region32: #{encoder_forward.1} parent=11 // pred_fallthru
          _
        // Predicated region
        $region33: #{encoder_forward.1} parent=11 // pred_check
          %p334 = pneg %p173
        $region34: #{encoder_forward.1} parent=11 // pred_check_branch
          %336 = sbr.rel (%p334) target = $region36
        $region35: #{encoder_forward.1} parent=11 // pred_region
          _
        $region36: #{encoder_forward.1} parent=11 // pred_fallthru
          _
        // Predicated region
        $region37: #{encoder_forward.1} parent=11 // pred_check
          %p337 = pneg %p194
        $region38: #{encoder_forward.1} parent=11 // pred_check_branch
          %339 = sbr.rel (%p337) target = $region40
        $region39: #{encoder_forward.1} parent=11 // pred_region
          _
        $region40: #{encoder_forward.1} parent=11 // pred_fallthru
          _
        // Predicated region
        $region41: #{encoder_forward.1} parent=11 // pred_check
          %p340 = pneg %p215
        $region42: #{encoder_forward.1} parent=11 // pred_check_branch
          %342 = sbr.rel (%p340) target = $region44
        $region43: #{encoder_forward.1} parent=11 // pred_region
          _
        $region44: #{encoder_forward.1} parent=11 // pred_fallthru
          _
        // Predicated region
        $region45: #{encoder_forward.1} parent=11 // pred_check
          %p343 = pneg %p236
        $region46: #{encoder_forward.1} parent=11 // pred_check_branch
          %345 = sbr.rel (%p343) target = $region48
        $region47: #{encoder_forward.1} parent=11 // pred_region
          _
        $region48: #{encoder_forward.1} parent=11 // pred_fallthru
          _
        // Predicated region
        $region49: #{encoder_forward.1} parent=11 // pred_check
          %p346 = pneg %p257
        $region50: #{encoder_forward.1} parent=11 // pred_check_branch
          %348 = sbr.rel (%p346) target = $region52
        $region51: #{encoder_forward.1} parent=11 // pred_region
          _
        $region52: #{encoder_forward.1} parent=11 // pred_fallthru
          _
        // Predicated region
        $region53: #{encoder_forward.1} parent=11 // pred_check
          %p349 = pneg %p278
        $region54: #{encoder_forward.1} parent=11 // pred_check_branch
          %351 = sbr.rel (%p349) target = $region56
        $region55: #{encoder_forward.1} parent=11 // pred_region
          _
        $region56: #{encoder_forward.1} parent=11 // pred_fallthru
          _
      $region12: #{encoder_forward.1} parent=5 // pred_fallthru
        _
      %p352 = scmp.lt.s32.totalorder %s21, 2
      // Predicated region
      $region57: #{encoder_forward.1} parent=5 // pred_check
        %p353 = pneg %p352
      $region58: #{encoder_forward.1} parent=5 // pred_check_branch
        %355 = sbr.rel (%p353) target = $region60
      $region59: #{encoder_forward.1} parent=5 // pred_region
        // Predicated region
        $region61: #{encoder_forward.1} parent=59 // pred_check
          %p356 = pneg %p41
        $region62: #{encoder_forward.1} parent=59 // pred_check_branch
          %358 = sbr.rel (%p356) target = $region64
        $region63: #{encoder_forward.1} parent=59 // pred_region
          %p359 = scmp.lt.s32.totalorder %s21, 1
          %s360 = scalar_select %p359, %s21, 1
          %s361 = smul.addr %s360, 4
          %s362 = smul.addr %s361, 4
          %s363 = scalar_lea.vmem %s0, %s362
        $region64: #{encoder_forward.1} parent=59 // pred_fallthru
          _
      $region60: #{encoder_forward.1} parent=5 // pred_fallthru
        _
      %p364 = scmp.le.s32.totalorder 1, %s21
      %p365 = scmp.lt.s32.totalorder %s21, 3
      %p366 = pnand %p364, %p365
      %p367 = pneg %p366
      // Predicated region
      $region65: #{encoder_forward.1} parent=5 // pred_check
        _
      $region66: #{encoder_forward.1} parent=5 // pred_check_branch
        %369 = sbr.rel (%p366) target = $region68
      $region67: #{encoder_forward.1} parent=5 // pred_region
        %s370 = ssub.s32 %s21, 1
        %p371 = scmp.lt.s32.totalorder %s26, 1
        %s372 = scalar_select %p371, %s26, 1
        %s373 = smul.addr %s372, 4
        %s374 = smul.addr %s373, 4
        %s375 = scalar_lea.vmem %s0, %s374
        %p376 = pneg %p47
        %p377 = pneg %p44
        %p378 = pneg %p68
        %p379 = pneg %p65
        %p380 = pneg %p89
        %p381 = pneg %p86
        %p382 = pneg %p110
        %p383 = pneg %p107
        %p384 = pneg %p131
        %p385 = pneg %p128
        %p386 = pneg %p152
        %p387 = pneg %p149
        %p388 = pneg %p173
        %p389 = pneg %p170
        %p390 = pneg %p194
        %p391 = pneg %p191
        %p392 = pneg %p215
        %p393 = pneg %p212
        %p394 = pneg %p236
        %p395 = pneg %p233
        %p396 = pneg %p257
        %p397 = pneg %p254
        %p398 = pneg %p278
        %p399 = pneg %p275
        %p400 = pneg %p304
        %p401 = pneg %p301
        %s402 = sand.u32 %s291, 1
        %s403 = scalar_lea.sflag [#allocation3], %s402
        %s404 = sand.u32 %s291, 1
        %s405 = scalar_lea.vmem [#allocation2], %s404
        %p406 = scmp.lt.s32.totalorder %s26, 1
        %s407 = scalar_select %p406, %s26, 1
        %s408 = smul.addr %s407, 4
        %s409 = smul.addr %s408, 4
        %s410 = scalar_lea.vmem %s0, %s409
        %v412 = vld [vmem:[%s410] sm:$0xf]
        %v413 = vld [vmem:[%s410 + $0x4] sm:$0xf]
        %v414 = vld [vmem:[%s410 + $0x8] sm:$0xf]
        %v415 = vld [vmem:[%s410 + $0xc] sm:$0xf]
        %v416 = vld [vmem:[%s1] sm:$0xf]
        %v417 = vld [vmem:[%s1 + $0x4] sm:$0xf]
        %v420 = vunpack.c.l.b16 %v416
        %v421 = vunpack.c.l.b16 %v417
        %v422 = vpack.c.b16 %v421, %v420
        %v427 = vunpack.c.l.b16 %v412
        %v428 = vunpack.c.l.b16 %v413
        %v429 = vunpack.c.l.b16 %v414
        %v430 = vunpack.c.l.b16 %v415
        %v431 = vpack.c.b16 %v428, %v427
        %v432 = vpack.c.b16 %v430, %v429
        %vm435 = vcmask 261120
        %v437 = vsel %vm435, %v422, 0
        %439 = vmatprep.subr.bf16.mxu0 0
        %440 = vmatpush1.bf16.msra.mxu0 %v431
        %441 = vmatprep.subr.bf16.mxu0 0
        %442 = vmatpush1.bf16.msra.mxu0 %v432
        %443 = vmatprep.subr.bf16.mxu0 0
        %444 = vmatpush1.bf16.msra.mxu0 0
        %445 = vmatprep.subr.bf16.mxu0 0
        %446 = vmatpush1.bf16.msra.mxu0 0
        %447 = vmatprep.subr.bf16.mxu0 0
        %448 = vmatpush1.bf16.msra.mxu0 0
        %449 = vmatprep.subr.bf16.mxu0 0
        %450 = vmatpush1.bf16.msra.mxu0 0
        %451 = vmatprep.subr.bf16.mxu0 0
        %452 = vmatpush1.bf16.msra.mxu0 0
        %453 = vmatprep.subr.bf16.mxu0 0
        %454 = vmatpush1.bf16.msra.mxu0 0
        %455 = vmatprep.subr.bf16.mxu0 0
        %456 = vmatpush1.bf16.msra.mxu0 0
        %457 = vmatprep.subr.bf16.mxu0 0
        %458 = vmatpush1.bf16.msra.mxu0 0
        %459 = vmatprep.subr.bf16.mxu0 0
        %460 = vmatpush1.bf16.msra.mxu0 0
        %461 = vmatprep.subr.bf16.mxu0 0
        %462 = vmatpush1.bf16.msra.mxu0 0
        %463 = vmatprep.subr.bf16.mxu0 0
        %464 = vmatpush1.bf16.msra.mxu0 0
        %465 = vmatprep.subr.bf16.mxu0 0
        %466 = vmatpush1.bf16.msra.mxu0 0
        %467 = vmatprep.subr.bf16.mxu0 0
        %468 = vmatpush1.bf16.msra.mxu0 0
        %469 = vmatprep.subr.bf16.mxu0 0
        %470 = vmatpush1.bf16.msra.mxu0 0
        %471 = vmatprep.mubr.bf16.mxu0 0
        %472 = vmatmul.mubr.bf16.gmra.mrb[0].mxu0 %v437
        %v473 = vpop.f32.mrb[0].mxu0
        %v474 = vadd.f32 0.0, %v473
        %v475 = vpop.f32.mrb[0].mxu0
        %v476 = vpop.f32.mrb[0].mxu0
        %v477 = vadd.f32 0.0, %v476
        %v478 = vpop.f32.mrb[0].mxu0
        %479 = vdwg.mxu0
        %v480 = vpack.c.bf16 %v477, %v474
        %v481 = vld [vmem:[%s2] sm:$0xf]
        %v482 = vld [vmem:[%s2 + $0x4] sm:$0xf]
        %v483 = vld [vmem:[%s2 + $0x8] sm:$0xf]
        %v484 = vld [vmem:[%s2 + $0xc] sm:$0xf]
        %v485 = vld [vmem:[%s2 + $0x10] sm:$0xf]
        %v486 = vld [vmem:[%s2 + $0x14] sm:$0xf]
        %v487 = vld [vmem:[%s2 + $0x18] sm:$0xf]
        %v488 = vld [vmem:[%s2 + $0x1c] sm:$0xf]
        %v489 = vld [vmem:[%s2 + $0x20] sm:$0xf]
        %v490 = vld [vmem:[%s2 + $0x24] sm:$0xf]
        %v491 = vld [vmem:[%s2 + $0x28] sm:$0xf]
        %v492 = vld [vmem:[%s2 + $0x2c] sm:$0xf]
        %s493 = scalar_lea.vmem %s1, 8
        %v494 = vld [vmem:[%s493] sm:$0xf]
        %v495 = vld [vmem:[%s493 + $0x4] sm:$0xf]
        %v498 = vunpack.c.l.b16 %v494
        %v499 = vunpack.c.l.b16 %v495
        %v500 = vpack.c.b16 %v499, %v498
        %v502 = vsel %vm435, %v500, 0
        %504 = vmatprep.subr.bf16.mxu0 0
        %505 = vmatpush1.bf16.msra.mxu0 %v431
        %506 = vmatprep.subr.bf16.mxu0 0
        %507 = vmatpush1.bf16.msra.mxu0 %v432
        %508 = vmatprep.subr.bf16.mxu0 0
        %509 = vmatpush1.bf16.msra.mxu0 0
        %510 = vmatprep.subr.bf16.mxu0 0
        %511 = vmatpush1.bf16.msra.mxu0 0
        %512 = vmatprep.subr.bf16.mxu0 0
        %513 = vmatpush1.bf16.msra.mxu0 0
        %514 = vmatprep.subr.bf16.mxu0 0
        %515 = vmatpush1.bf16.msra.mxu0 0
        %516 = vmatprep.subr.bf16.mxu0 0
        %517 = vmatpush1.bf16.msra.mxu0 0
        %518 = vmatprep.subr.bf16.mxu0 0
        %519 = vmatpush1.bf16.msra.mxu0 0
        %520 = vmatprep.subr.bf16.mxu0 0
        %521 = vmatpush1.bf16.msra.mxu0 0
        %522 = vmatprep.subr.bf16.mxu0 0
        %523 = vmatpush1.bf16.msra.mxu0 0
        %524 = vmatprep.subr.bf16.mxu0 0
        %525 = vmatpush1.bf16.msra.mxu0 0
        %526 = vmatprep.subr.bf16.mxu0 0
        %527 = vmatpush1.bf16.msra.mxu0 0
        %528 = vmatprep.subr.bf16.mxu0 0
        %529 = vmatpush1.bf16.msra.mxu0 0
        %530 = vmatprep.subr.bf16.mxu0 0
        %531 = vmatpush1.bf16.msra.mxu0 0
        %532 = vmatprep.subr.bf16.mxu0 0
        %533 = vmatpush1.bf16.msra.mxu0 0
        %534 = vmatprep.subr.bf16.mxu0 0
        %535 = vmatpush1.bf16.msra.mxu0 0
        %536 = vmatprep.mubr.bf16.mxu0 0
        %537 = vmatmul.mubr.bf16.gmra.mrb[0].mxu0 %v502
        %v538 = vpop.f32.mrb[0].mxu0
        %v539 = vadd.f32 0.0, %v538
        %v540 = vpop.f32.mrb[0].mxu0
        %v541 = vpop.f32.mrb[0].mxu0
        %v542 = vadd.f32 0.0, %v541
        %v543 = vpop.f32.mrb[0].mxu0
        %544 = vdwg.mxu0
        %v545 = vpack.c.bf16 %v542, %v539
        %s546 = scalar_lea.vmem %s2, 48
        %v547 = vld [vmem:[%s546] sm:$0xf]
        %v548 = vld [vmem:[%s546 + $0x4] sm:$0xf]
        %v549 = vld [vmem:[%s546 + $0x8] sm:$0xf]
        %v550 = vld [vmem:[%s546 + $0xc] sm:$0xf]
        %v551 = vld [vmem:[%s546 + $0x10] sm:$0xf]
        %v552 = vld [vmem:[%s546 + $0x14] sm:$0xf]
        %v553 = vld [vmem:[%s546 + $0x18] sm:$0xf]
        %v554 = vld [vmem:[%s546 + $0x1c] sm:$0xf]
        %v555 = vld [vmem:[%s546 + $0x20] sm:$0xf]
        %v556 = vld [vmem:[%s546 + $0x24] sm:$0xf]
        %v557 = vld [vmem:[%s546 + $0x28] sm:$0xf]
        %v558 = vld [vmem:[%s546 + $0x2c] sm:$0xf]
        %v571 = vunpack.c.l.b16 %v547
        %v572 = vunpack.c.l.b16 %v548
        %v573 = vunpack.c.l.b16 %v549
        %v574 = vunpack.c.l.b16 %v550
        %v575 = vunpack.c.l.b16 %v551
        %v576 = vunpack.c.l.b16 %v552
        %v577 = vunpack.c.l.b16 %v553
        %v578 = vunpack.c.l.b16 %v554
        %v579 = vunpack.c.l.b16 %v555
        %v580 = vunpack.c.l.b16 %v556
        %v581 = vunpack.c.l.b16 %v557
        %v582 = vunpack.c.l.b16 %v558
        %v583 = vpack.c.b16 %v572, %v571
        %v584 = vpack.c.b16 %v574, %v573
        %v585 = vpack.c.b16 %v576, %v575
        %v586 = vpack.c.b16 %v578, %v577
        %v587 = vpack.c.b16 %v580, %v579
        %v588 = vpack.c.b16 %v582, %v581
        %vm595 = vcmask 785408
        %v597 = vsel %vm595, %v545, 0
        %599 = vmatprep.subr.bf16.mxu0 0
        %600 = vmatpush1.bf16.msra.mxu0 %v583
        %601 = vmatprep.subr.bf16.mxu0 0
        %602 = vmatpush1.bf16.msra.mxu0 %v584
        %603 = vmatprep.subr.bf16.mxu0 0
        %604 = vmatpush1.bf16.msra.mxu0 %v585
        %605 = vmatprep.subr.bf16.mxu0 0
        %606 = vmatpush1.bf16.msra.mxu0 %v586
        %607 = vmatprep.subr.bf16.mxu0 0
        %608 = vmatpush1.bf16.msra.mxu0 %v587
        %609 = vmatprep.subr.bf16.mxu0 0
        %610 = vmatpush1.bf16.msra.mxu0 %v588
        %611 = vmatprep.subr.bf16.mxu0 0
        %612 = vmatpush1.bf16.msra.mxu0 0
        %613 = vmatprep.subr.bf16.mxu0 0
        %614 = vmatpush1.bf16.msra.mxu0 0
        %615 = vmatprep.subr.bf16.mxu0 0
        %616 = vmatpush1.bf16.msra.mxu0 0
        %617 = vmatprep.subr.bf16.mxu0 0
        %618 = vmatpush1.bf16.msra.mxu0 0
        %619 = vmatprep.subr.bf16.mxu0 0
        %620 = vmatpush1.bf16.msra.mxu0 0
        %621 = vmatprep.subr.bf16.mxu0 0
        %622 = vmatpush1.bf16.msra.mxu0 0
        %623 = vmatprep.subr.bf16.mxu0 0
        %624 = vmatpush1.bf16.msra.mxu0 0
        %625 = vmatprep.subr.bf16.mxu0 0
        %626 = vmatpush1.bf16.msra.mxu0 0
        %627 = vmatprep.subr.bf16.mxu0 0
        %628 = vmatpush1.bf16.msra.mxu0 0
        %629 = vmatprep.subr.bf16.mxu0 0
        %630 = vmatpush1.bf16.msra.mxu0 0
        %631 = vmatprep.mubr.bf16.mxu0 0
        %632 = vmatmul.mubr.bf16.gmra.mrb[0].mxu0 %v597
        %v633 = vpop.f32.mrb[0].mxu0
        %v634 = vadd.f32 0.0, %v633
        %v635 = vpop.f32.mrb[0].mxu0
        %v636 = vpop.f32.mrb[0].mxu0
        %v637 = vadd.f32 0.0, %v636
        %v638 = vpop.f32.mrb[0].mxu0
        %639 = vdwg.mxu0
        %v652 = vunpack.c.l.b16 %v481
        %v653 = vunpack.c.l.b16 %v482
        %v654 = vunpack.c.l.b16 %v483
        %v655 = vunpack.c.l.b16 %v484
        %v656 = vunpack.c.l.b16 %v485
        %v657 = vunpack.c.l.b16 %v486
        %v658 = vunpack.c.l.b16 %v487
        %v659 = vunpack.c.l.b16 %v488
        %v660 = vunpack.c.l.b16 %v489
        %v661 = vunpack.c.l.b16 %v490
        %v662 = vunpack.c.l.b16 %v491
        %v663 = vunpack.c.l.b16 %v492
        %v664 = vpack.c.b16 %v653, %v652
        %v665 = vpack.c.b16 %v655, %v654
        %v666 = vpack.c.b16 %v657, %v656
        %v667 = vpack.c.b16 %v659, %v658
        %v668 = vpack.c.b16 %v661, %v660
        %v669 = vpack.c.b16 %v663, %v662
        %v677 = vsel %vm595, %v480, 0
        %679 = vmatprep.subr.bf16.mxu0 0
        %680 = vmatpush1.bf16.msra.mxu0 %v664
        %681 = vmatprep.subr.bf16.mxu0 0
        %682 = vmatpush1.bf16.msra.mxu0 %v665
        %683 = vmatprep.subr.bf16.mxu0 0
        %684 = vmatpush1.bf16.msra.mxu0 %v666
        %685 = vmatprep.subr.bf16.mxu0 0
        %686 = vmatpush1.bf16.msra.mxu0 %v667
        %687 = vmatprep.subr.bf16.mxu0 0
        %688 = vmatpush1.bf16.msra.mxu0 %v668
        %689 = vmatprep.subr.bf16.mxu0 0
        %690 = vmatpush1.bf16.msra.mxu0 %v669
        %691 = vmatprep.subr.bf16.mxu0 0
        %692 = vmatpush1.bf16.msra.mxu0 0
        %693 = vmatprep.subr.bf16.mxu0 0
        %694 = vmatpush1.bf16.msra.mxu0 0
        %695 = vmatprep.subr.bf16.mxu0 0
        %696 = vmatpush1.bf16.msra.mxu0 0
        %697 = vmatprep.subr.bf16.mxu0 0
        %698 = vmatpush1.bf16.msra.mxu0 0
        %699 = vmatprep.subr.bf16.mxu0 0
        %700 = vmatpush1.bf16.msra.mxu0 0
        %701 = vmatprep.subr.bf16.mxu0 0
        %702 = vmatpush1.bf16.msra.mxu0 0
        %703 = vmatprep.subr.bf16.mxu0 0
        %704 = vmatpush1.bf16.msra.mxu0 0
        %705 = vmatprep.subr.bf16.mxu0 0
        %706 = vmatpush1.bf16.msra.mxu0 0
        %707 = vmatprep.subr.bf16.mxu0 0
        %708 = vmatpush1.bf16.msra.mxu0 0
        %709 = vmatprep.subr.bf16.mxu0 0
        %710 = vmatpush1.bf16.msra.mxu0 0
        %711 = vmatprep.mubr.bf16.mxu0 0
        %712 = vmatmul.mubr.bf16.gmra.mrb[0].mxu0 %v677
        %v713 = vpop.f32.mrb[0].mxu0
        %v714 = vadd.f32 %v634, %v713
        %v715 = vpop.f32.mrb[0].mxu0
        %v716 = vpop.f32.mrb[0].mxu0
        %v717 = vadd.f32 %v637, %v716
        %v718 = vpop.f32.mrb[0].mxu0
        %719 = vdwg.mxu0
        %s720 = scalar_lea.vmem %s1, 16
        %v721 = vld [vmem:[%s720] sm:$0xf]
        %v722 = vld [vmem:[%s720 + $0x4] sm:$0xf]
        %v725 = vunpack.c.l.b16 %v721
        %v726 = vunpack.c.l.b16 %v722
        %v727 = vpack.c.b16 %v726, %v725
        %v729 = vsel %vm435, %v727, 0
        %731 = vmatprep.subr.bf16.mxu0 0
        %732 = vmatpush1.bf16.msra.mxu0 %v431
        %733 = vmatprep.subr.bf16.mxu0 0
        %734 = vmatpush1.bf16.msra.mxu0 %v432
        %735 = vmatprep.subr.bf16.mxu0 0
        %736 = vmatpush1.bf16.msra.mxu0 0
        %737 = vmatprep.subr.bf16.mxu0 0
        %738 = vmatpush1.bf16.msra.mxu0 0
        %739 = vmatprep.subr.bf16.mxu0 0
        %740 = vmatpush1.bf16.msra.mxu0 0
        %741 = vmatprep.subr.bf16.mxu0 0
        %742 = vmatpush1.bf16.msra.mxu0 0
        %743 = vmatprep.subr.bf16.mxu0 0
        %744 = vmatpush1.bf16.msra.mxu0 0
        %745 = vmatprep.subr.bf16.mxu0 0
        %746 = vmatpush1.bf16.msra.mxu0 0
        %747 = vmatprep.subr.bf16.mxu0 0
        %748 = vmatpush1.bf16.msra.mxu0 0
        %749 = vmatprep.subr.bf16.mxu0 0
        %750 = vmatpush1.bf16.msra.mxu0 0
        %751 = vmatprep.subr.bf16.mxu0 0
        %752 = vmatpush1.bf16.msra.mxu0 0
        %753 = vmatprep.subr.bf16.mxu0 0
        %754 = vmatpush1.bf16.msra.mxu0 0
        %755 = vmatprep.subr.bf16.mxu0 0
        %756 = vmatpush1.bf16.msra.mxu0 0
        %757 = vmatprep.subr.bf16.mxu0 0
        %758 = vmatpush1.bf16.msra.mxu0 0
        %759 = vmatprep.subr.bf16.mxu0 0
        %760 = vmatpush1.bf16.msra.mxu0 0
        %761 = vmatprep.subr.bf16.mxu0 0
        %762 = vmatpush1.bf16.msra.mxu0 0
        %763 = vmatprep.mubr.bf16.mxu0 0
        %764 = vmatmul.mubr.bf16.gmra.mrb[0].mxu0 %v729
        %v765 = vpop.f32.mrb[0].mxu0
        %v766 = vadd.f32 0.0, %v765
        %v767 = vpop.f32.mrb[0].mxu0
        %v768 = vpop.f32.mrb[0].mxu0
        %v769 = vadd.f32 0.0, %v768
        %v770 = vpop.f32.mrb[0].mxu0
        %771 = vdwg.mxu0
        %v772 = vpack.c.bf16 %v769, %v766
        %s773 = scalar_lea.vmem %s2, 96
        %v774 = vld [vmem:[%s773] sm:$0xf]
        %v775 = vld [vmem:[%s773 + $0x4] sm:$0xf]
        %v776 = vld [vmem:[%s773 + $0x8] sm:$0xf]
        %v777 = vld [vmem:[%s773 + $0xc] sm:$0xf]
        %v778 = vld [vmem:[%s773 + $0x10] sm:$0xf]
        %v779 = vld [vmem:[%s773 + $0x14] sm:$0xf]
        %v780 = vld [vmem:[%s773 + $0x18] sm:$0xf]
        %v781 = vld [vmem:[%s773 + $0x1c] sm:$0xf]
        %v782 = vld [vmem:[%s773 + $0x20] sm:$0xf]
        %v783 = vld [vmem:[%s773 + $0x24] sm:$0xf]
        %v784 = vld [vmem:[%s773 + $0x28] sm:$0xf]
        %v785 = vld [vmem:[%s773 + $0x2c] sm:$0xf]
        %v798 = vunpack.c.l.b16 %v774
        %v799 = vunpack.c.l.b16 %v775
        %v800 = vunpack.c.l.b16 %v776
        %v801 = vunpack.c.l.b16 %v777
        %v802 = vunpack.c.l.b16 %v778
        %v803 = vunpack.c.l.b16 %v779
        %v804 = vunpack.c.l.b16 %v780
        %v805 = vunpack.c.l.b16 %v781
        %v806 = vunpack.c.l.b16 %v782
        %v807 = vunpack.c.l.b16 %v783
        %v808 = vunpack.c.l.b16 %v784
        %v809 = vunpack.c.l.b16 %v785
        %v810 = vpack.c.b16 %v799, %v798
        %v811 = vpack.c.b16 %v801, %v800
        %v812 = vpack.c.b16 %v803, %v802
        %v813 = vpack.c.b16 %v805, %v804
        %v814 = vpack.c.b16 %v807, %v806
        %v815 = vpack.c.b16 %v809, %v808
        %v823 = vsel %vm595, %v772, 0
        %825 = vmatprep.subr.bf16.mxu0 0
        %826 = vmatpush1.bf16.msra.mxu0 %v810
        %827 = vmatprep.subr.bf16.mxu0 0
        %828 = vmatpush1.bf16.msra.mxu0 %v811
        %829 = vmatprep.subr.bf16.mxu0 0
        %830 = vmatpush1.bf16.msra.mxu0 %v812
        %831 = vmatprep.subr.bf16.mxu0 0
        %832 = vmatpush1.bf16.msra.mxu0 %v813
        %833 = vmatprep.subr.bf16.mxu0 0
        %834 = vmatpush1.bf16.msra.mxu0 %v814
        %835 = vmatprep.subr.bf16.mxu0 0
        %836 = vmatpush1.bf16.msra.mxu0 %v815
        %837 = vmatprep.subr.bf16.mxu0 0
        %838 = vmatpush1.bf16.msra.mxu0 0
        %839 = vmatprep.subr.bf16.mxu0 0
        %840 = vmatpush1.bf16.msra.mxu0 0
        %841 = vmatprep.subr.bf16.mxu0 0
        %842 = vmatpush1.bf16.msra.mxu0 0
        %843 = vmatprep.subr.bf16.mxu0 0
        %844 = vmatpush1.bf16.msra.mxu0 0
        %845 = vmatprep.subr.bf16.mxu0 0
        %846 = vmatpush1.bf16.msra.mxu0 0
        %847 = vmatprep.subr.bf16.mxu0 0
        %848 = vmatpush1.bf16.msra.mxu0 0
        %849 = vmatprep.subr.bf16.mxu0 0
        %850 = vmatpush1.bf16.msra.mxu0 0
        %851 = vmatprep.subr.bf16.mxu0 0
        %852 = vmatpush1.bf16.msra.mxu0 0
        %853 = vmatprep.subr.bf16.mxu0 0
        %854 = vmatpush1.bf16.msra.mxu0 0
        %855 = vmatprep.subr.bf16.mxu0 0
        %856 = vmatpush1.bf16.msra.mxu0 0
        %857 = vmatprep.mubr.bf16.mxu0 0
        %858 = vmatmul.mubr.bf16.gmra.mrb[0].mxu0 %v823
        %v859 = vpop.f32.mrb[0].mxu0
        %v860 = vadd.f32 0.0, %v859
        %v861 = vpop.f32.mrb[0].mxu0
        %v862 = vpop.f32.mrb[0].mxu0
        %v863 = vadd.f32 0.0, %v862
        %v864 = vpop.f32.mrb[0].mxu0
        %865 = vdwg.mxu0
        %v866 = vadd.f32 %v714, %v860
        %v867 = vadd.f32 %v717, %v863
        %s868 = scalar_lea.vmem %s1, 24
        %v869 = vld [vmem:[%s868] sm:$0xf]
        %v870 = vld [vmem:[%s868 + $0x4] sm:$0xf]
        %v873 = vunpack.c.l.b16 %v869
        %v874 = vunpack.c.l.b16 %v870
        %v875 = vpack.c.b16 %v874, %v873
        %v877 = vsel %vm435, %v875, 0
        %879 = vmatprep.subr.bf16.mxu0 0
        %880 = vmatpush1.bf16.msra.mxu0 %v431
        %881 = vmatprep.subr.bf16.mxu0 0
        %882 = vmatpush1.bf16.msra.mxu0 %v432
        %883 = vmatprep.subr.bf16.mxu0 0
        %884 = vmatpush1.bf16.msra.mxu0 0
        %885 = vmatprep.subr.bf16.mxu0 0
        %886 = vmatpush1.bf16.msra.mxu0 0
        %887 = vmatprep.subr.bf16.mxu0 0
        %888 = vmatpush1.bf16.msra.mxu0 0
        %889 = vmatprep.subr.bf16.mxu0 0
        %890 = vmatpush1.bf16.msra.mxu0 0
        %891 = vmatprep.subr.bf16.mxu0 0
        %892 = vmatpush1.bf16.msra.mxu0 0
        %893 = vmatprep.subr.bf16.mxu0 0
        %894 = vmatpush1.bf16.msra.mxu0 0
        %895 = vmatprep.subr.bf16.mxu0 0
        %896 = vmatpush1.bf16.msra.mxu0 0
        %897 = vmatprep.subr.bf16.mxu0 0
        %898 = vmatpush1.bf16.msra.mxu0 0
        %899 = vmatprep.subr.bf16.mxu0 0
        %900 = vmatpush1.bf16.msra.mxu0 0
        %901 = vmatprep.subr.bf16.mxu0 0
        %902 = vmatpush1.bf16.msra.mxu0 0
        %903 = vmatprep.subr.bf16.mxu0 0
        %904 = vmatpush1.bf16.msra.mxu0 0
        %905 = vmatprep.subr.bf16.mxu0 0
        %906 = vmatpush1.bf16.msra.mxu0 0
        %907 = vmatprep.subr.bf16.mxu0 0
        %908 = vmatpush1.bf16.msra.mxu0 0
        %909 = vmatprep.subr.bf16.mxu0 0
        %910 = vmatpush1.bf16.msra.mxu0 0
        %911 = vmatprep.mubr.bf16.mxu0 0
        %912 = vmatmul.mubr.bf16.gmra.mrb[0].mxu0 %v877
        %v913 = vpop.f32.mrb[0].mxu0
        %v914 = vadd.f32 0.0, %v913
        %v915 = vpop.f32.mrb[0].mxu0
        %v916 = vpop.f32.mrb[0].mxu0
        %v917 = vadd.f32 0.0, %v916
        %v918 = vpop.f32.mrb[0].mxu0
        %919 = vdwg.mxu0
        %v920 = vpack.c.bf16 %v917, %v914
        %s921 = scalar_lea.vmem %s2, 144
        %v922 = vld [vmem:[%s921] sm:$0xf]
        %v923 = vld [vmem:[%s921 + $0x4] sm:$0xf]
        %v924 = vld [vmem:[%s921 + $0x8] sm:$0xf]
        %v925 = vld [vmem:[%s921 + $0xc] sm:$0xf]
        %v926 = vld [vmem:[%s921 + $0x10] sm:$0xf]
        %v927 = vld [vmem:[%s921 + $0x14] sm:$0xf]
        %v928 = vld [vmem:[%s921 + $0x18] sm:$0xf]
        %v929 = vld [vmem:[%s921 + $0x1c] sm:$0xf]
        %v930 = vld [vmem:[%s921 + $0x20] sm:$0xf]
        %v931 = vld [vmem:[%s921 + $0x24] sm:$0xf]
        %v932 = vld [vmem:[%s921 + $0x28] sm:$0xf]
        %v933 = vld [vmem:[%s921 + $0x2c] sm:$0xf]
        %v946 = vunpack.c.l.b16 %v922
        %v947 = vunpack.c.l.b16 %v923
        %v948 = vunpack.c.l.b16 %v924
        %v949 = vunpack.c.l.b16 %v925
        %v950 = vunpack.c.l.b16 %v926
        %v951 = vunpack.c.l.b16 %v927
        %v952 = vunpack.c.l.b16 %v928
        %v953 = vunpack.c.l.b16 %v929
        %v954 = vunpack.c.l.b16 %v930
        %v955 = vunpack.c.l.b16 %v931
        %v956 = vunpack.c.l.b16 %v932
        %v957 = vunpack.c.l.b16 %v933
        %v958 = vpack.c.b16 %v947, %v946
        %v959 = vpack.c.b16 %v949, %v948
        %v960 = vpack.c.b16 %v951, %v950
        %v961 = vpack.c.b16 %v953, %v952
        %v962 = vpack.c.b16 %v955, %v954
        %v963 = vpack.c.b16 %v957, %v956
        %v971 = vsel %vm595, %v920, 0
        %973 = vmatprep.subr.bf16.mxu0 0
        %974 = vmatpush1.bf16.msra.mxu0 %v958
        %975 = vmatprep.subr.bf16.mxu0 0
        %976 = vmatpush1.bf16.msra.mxu0 %v959
        %977 = vmatprep.subr.bf16.mxu0 0
        %978 = vmatpush1.bf16.msra.mxu0 %v960
        %979 = vmatprep.subr.bf16.mxu0 0
        %980 = vmatpush1.bf16.msra.mxu0 %v961
        %981 = vmatprep.subr.bf16.mxu0 0
        %982 = vmatpush1.bf16.msra.mxu0 %v962
        %983 = vmatprep.subr.bf16.mxu0 0
        %984 = vmatpush1.bf16.msra.mxu0 %v963
        %985 = vmatprep.subr.bf16.mxu0 0
        %986 = vmatpush1.bf16.msra.mxu0 0
        %987 = vmatprep.subr.bf16.mxu0 0
        %988 = vmatpush1.bf16.msra.mxu0 0
        %989 = vmatprep.subr.bf16.mxu0 0
        %990 = vmatpush1.bf16.msra.mxu0 0
        %991 = vmatprep.subr.bf16.mxu0 0
        %992 = vmatpush1.bf16.msra.mxu0 0
        %993 = vmatprep.subr.bf16.mxu0 0
        %994 = vmatpush1.bf16.msra.mxu0 0
        %995 = vmatprep.subr.bf16.mxu0 0
        %996 = vmatpush1.bf16.msra.mxu0 0
        %997 = vmatprep.subr.bf16.mxu0 0
        %998 = vmatpush1.bf16.msra.mxu0 0
        %999 = vmatprep.subr.bf16.mxu0 0
        %1000 = vmatpush1.bf16.msra.mxu0 0
        %1001 = vmatprep.subr.bf16.mxu0 0
        %1002 = vmatpush1.bf16.msra.mxu0 0
        %1003 = vmatprep.subr.bf16.mxu0 0
        %1004 = vmatpush1.bf16.msra.mxu0 0
        %1005 = vmatprep.mubr.bf16.mxu0 0
        %1006 = vmatmul.mubr.bf16.gmra.mrb[0].mxu0 %v971
        %v1007 = vpop.f32.mrb[0].mxu0
        %v1008 = vadd.f32 0.0, %v1007
        %v1009 = vpop.f32.mrb[0].mxu0
        %v1010 = vpop.f32.mrb[0].mxu0
        %v1011 = vadd.f32 0.0, %v1010
        %v1012 = vpop.f32.mrb[0].mxu0
        %1013 = vdwg.mxu0
        %v1014 = vadd.f32 %v866, %v1008
        %v1015 = vadd.f32 %v867, %v1011
        %v1016 = vld [vmem:[%s3] sm:$0x1]
        %v1018 = vlaneseq
        %v1019 = vshrl.u32 %v1018, 7
        %v1020 = vsub.s32 0, %v1019
        %v1021 = vrot.slane %v1016, %v1020
        %v1023 = vadd.f32 %v1014, %v1021
        %v1024 = vadd.f32 %v1015, %v1021
        %v1025 = vmax.f32 %v1023, 0.0
        %v1026 = vmax.f32 %v1024, 0.0
        %v1027 = vpack.c.bf16 %v1026, %v1025
        %v1028 = vld [vmem:[%s4] sm:$0xf]
        %vm1029 = vcmask 130048
        %v1031 = vsel %vm1029, %v1028, 0
        %1033 = vmatprep.subr.bf16.mxu0 0
        %1034 = vmatpush1.bf16.msra.mxu0 %v1027
        %1035 = vmatprep.subr.bf16.mxu0 0
        %1036 = vmatpush1.bf16.msra.mxu0 0
        %1037 = vmatprep.subr.bf16.mxu0 0
        %1038 = vmatpush1.bf16.msra.mxu0 0
        %1039 = vmatprep.subr.bf16.mxu0 0
        %1040 = vmatpush1.bf16.msra.mxu0 0
        %1041 = vmatprep.subr.bf16.mxu0 0
        %1042 = vmatpush1.bf16.msra.mxu0 0
        %1043 = vmatprep.subr.bf16.mxu0 0
        %1044 = vmatpush1.bf16.msra.mxu0 0
        %1045 = vmatprep.subr.bf16.mxu0 0
        %1046 = vmatpush1.bf16.msra.mxu0 0
        %1047 = vmatprep.subr.bf16.mxu0 0
        %1048 = vmatpush1.bf16.msra.mxu0 0
        %1049 = vmatprep.subr.bf16.mxu0 0
        %1050 = vmatpush1.bf16.msra.mxu0 0
        %1051 = vmatprep.subr.bf16.mxu0 0
        %1052 = vmatpush1.bf16.msra.mxu0 0
        %1053 = vmatprep.subr.bf16.mxu0 0
        %1054 = vmatpush1.bf16.msra.mxu0 0
        %1055 = vmatprep.subr.bf16.mxu0 0
        %1056 = vmatpush1.bf16.msra.mxu0 0
        %1057 = vmatprep.subr.bf16.mxu0 0
        %1058 = vmatpush1.bf16.msra.mxu0 0
        %1059 = vmatprep.subr.bf16.mxu0 0
        %1060 = vmatpush1.bf16.msra.mxu0 0
        %1061 = vmatprep.subr.bf16.mxu0 0
        %1062 = vmatpush1.bf16.msra.mxu0 0
        %1063 = vmatprep.subr.bf16.mxu0 0
        %1064 = vmatpush1.bf16.msra.mxu0 0
        %1065 = vmatprep.mubr.bf16.mxu0 0
        %1066 = vmatmul.mubr.bf16.gmra.mrb[0].mxu0 %v1031
        %v1067 = vpop.f32.mrb[0].mxu0
        %v1068 = vadd.f32 0.0, %v1067
        %v1069 = vpop.f32.mrb[0].mxu0
        %v1070 = vpop.f32.mrb[0].mxu0
        %v1071 = vpop.f32.mrb[0].mxu0
        %1072 = vdwg.mxu0
        %v1073 = vpack.c.bf16 %v1068, %v1068
        %v1074 = vld [vmem:[%s5] sm:$0xf]
        %v1075 = vld [vmem:[%s5 + $0x4] sm:$0xf]
        %v1076 = vld [vmem:[%s5 + $0x8] sm:$0xf]
        %v1077 = vld [vmem:[%s5 + $0xc] sm:$0xf]
        %v1078 = vld [vmem:[%s5 + $0x10] sm:$0xf]
        %v1079 = vld [vmem:[%s5 + $0x14] sm:$0xf]
        %v1080 = vld [vmem:[%s5 + $0x18] sm:$0xf]
        %v1081 = vld [vmem:[%s5 + $0x1c] sm:$0xf]
        %v1082 = vld [vmem:[%s5 + $0x20] sm:$0xf]
        %v1083 = vld [vmem:[%s5 + $0x24] sm:$0xf]
        %v1084 = vld [vmem:[%s5 + $0x28] sm:$0xf]
        %v1085 = vld [vmem:[%s5 + $0x2c] sm:$0xf]
        %v1086 = vld [vmem:[%s5 + $0x30] sm:$0xf]
        %v1087 = vld [vmem:[%s5 + $0x34] sm:$0xf]
        %v1088 = vld [vmem:[%s5 + $0x38] sm:$0xf]
        %v1089 = vld [vmem:[%s5 + $0x3c] sm:$0xf]
        %s1090 = scalar_lea.vmem %s4, 4
        %v1091 = vld [vmem:[%s1090] sm:$0xf]
        %v1093 = vsel %vm1029, %v1091, 0
        %1095 = vmatprep.subr.bf16.mxu0 0
        %1096 = vmatpush1.bf16.msra.mxu0 %v1027
        %1097 = vmatprep.subr.bf16.mxu0 0
        %1098 = vmatpush1.bf16.msra.mxu0 0
        %1099 = vmatprep.subr.bf16.mxu0 0
        %1100 = vmatpush1.bf16.msra.mxu0 0
        %1101 = vmatprep.subr.bf16.mxu0 0
        %1102 = vmatpush1.bf16.msra.mxu0 0
        %1103 = vmatprep.subr.bf16.mxu0 0
        %1104 = vmatpush1.bf16.msra.mxu0 0
        %1105 = vmatprep.subr.bf16.mxu0 0
        %1106 = vmatpush1.bf16.msra.mxu0 0
        %1107 = vmatprep.subr.bf16.mxu0 0
        %1108 = vmatpush1.bf16.msra.mxu0 0
        %1109 = vmatprep.subr.bf16.mxu0 0
        %1110 = vmatpush1.bf16.msra.mxu0 0
        %1111 = vmatprep.subr.bf16.mxu0 0
        %1112 = vmatpush1.bf16.msra.mxu0 0
        %1113 = vmatprep.subr.bf16.mxu0 0
        %1114 = vmatpush1.bf16.msra.mxu0 0
        %1115 = vmatprep.subr.bf16.mxu0 0
        %1116 = vmatpush1.bf16.msra.mxu0 0
        %1117 = vmatprep.subr.bf16.mxu0 0
        %1118 = vmatpush1.bf16.msra.mxu0 0
        %1119 = vmatprep.subr.bf16.mxu0 0
        %1120 = vmatpush1.bf16.msra.mxu0 0
        %1121 = vmatprep.subr.bf16.mxu0 0
        %1122 = vmatpush1.bf16.msra.mxu0 0
        %1123 = vmatprep.subr.bf16.mxu0 0
        %1124 = vmatpush1.bf16.msra.mxu0 0
        %1125 = vmatprep.subr.bf16.mxu0 0
        %1126 = vmatpush1.bf16.msra.mxu0 0
        %1127 = vmatprep.mubr.bf16.mxu0 0
        %1128 = vmatmul.mubr.bf16.gmra.mrb[0].mxu0 %v1093
        %v1129 = vpop.f32.mrb[0].mxu0
        %v1130 = vadd.f32 0.0, %v1129
        %v1131 = vpop.f32.mrb[0].mxu0
        %v1132 = vpop.f32.mrb[0].mxu0
        %v1133 = vpop.f32.mrb[0].mxu0
        %1134 = vdwg.mxu0
        %v1135 = vpack.c.bf16 %v1130, %v1130
        %s1136 = scalar_lea.vmem %s5, 64
        %v1137 = vld [vmem:[%s1136] sm:$0xf]
        %v1138 = vld [vmem:[%s1136 + $0x4] sm:$0xf]
        %v1139 = vld [vmem:[%s1136 + $0x8] sm:$0xf]
        %v1140 = vld [vmem:[%s1136 + $0xc] sm:$0xf]
        %v1141 = vld [vmem:[%s1136 + $0x10] sm:$0xf]
        %v1142 = vld [vmem:[%s1136 + $0x14] sm:$0xf]
        %v1143 = vld [vmem:[%s1136 + $0x18] sm:$0xf]
        %v1144 = vld [vmem:[%s1136 + $0x1c] sm:$0xf]
        %v1145 = vld [vmem:[%s1136 + $0x20] sm:$0xf]
        %v1146 = vld [vmem:[%s1136 + $0x24] sm:$0xf]
        %v1147 = vld [vmem:[%s1136 + $0x28] sm:$0xf]
        %v1148 = vld [vmem:[%s1136 + $0x2c] sm:$0xf]
        %v1149 = vld [vmem:[%s1136 + $0x30] sm:$0xf]
        %v1150 = vld [vmem:[%s1136 + $0x34] sm:$0xf]
        %v1151 = vld [vmem:[%s1136 + $0x38] sm:$0xf]
        %v1152 = vld [vmem:[%s1136 + $0x3c] sm:$0xf]
        %v1169 = vunpack.c.l.b16 %v1137
        %v1170 = vunpack.c.l.b16 %v1138
        %v1171 = vunpack.c.l.b16 %v1139
        %v1172 = vunpack.c.l.b16 %v1140
        %v1173 = vunpack.c.l.b16 %v1141
        %v1174 = vunpack.c.l.b16 %v1142
        %v1175 = vunpack.c.l.b16 %v1143
        %v1176 = vunpack.c.l.b16 %v1144
        %v1177 = vunpack.c.l.b16 %v1145
        %v1178 = vunpack.c.l.b16 %v1146
        %v1179 = vunpack.c.l.b16 %v1147
        %v1180 = vunpack.c.l.b16 %v1148
        %v1181 = vunpack.c.l.b16 %v1149
        %v1182 = vunpack.c.l.b16 %v1150
        %v1183 = vunpack.c.l.b16 %v1151
        %v1184 = vunpack.c.l.b16 %v1152
        %v1185 = vpack.c.b16 %v1170, %v1169
        %v1186 = vpack.c.b16 %v1172, %v1171
        %v1187 = vpack.c.b16 %v1174, %v1173
        %v1188 = vpack.c.b16 %v1176, %v1175
        %v1189 = vpack.c.b16 %v1178, %v1177
        %v1190 = vpack.c.b16 %v1180, %v1179
        %v1191 = vpack.c.b16 %v1182, %v1181
        %v1192 = vpack.c.b16 %v1184, %v1183
        %1201 = vmatprep.subr.bf16.mxu0 0
        %1202 = vmatpush1.bf16.msra.mxu0 %v1185
        %1203 = vmatprep.subr.bf16.mxu0 0
        %1204 = vmatpush1.bf16.msra.mxu0 %v1186
        %1205 = vmatprep.subr.bf16.mxu0 0
        %1206 = vmatpush1.bf16.msra.mxu0 %v1187
        %1207 = vmatprep.subr.bf16.mxu0 0
        %1208 = vmatpush1.bf16.msra.mxu0 %v1188
        %1209 = vmatprep.subr.bf16.mxu0 0
        %1210 = vmatpush1.bf16.msra.mxu0 %v1189
        %1211 = vmatprep.subr.bf16.mxu0 0
        %1212 = vmatpush1.bf16.msra.mxu0 %v1190
        %1213 = vmatprep.subr.bf16.mxu0 0
        %1214 = vmatpush1.bf16.msra.mxu0 %v1191
        %1215 = vmatprep.subr.bf16.mxu0 0
        %1216 = vmatpush1.bf16.msra.mxu0 %v1192
        %1217 = vmatprep.subr.bf16.mxu0 0
        %1218 = vmatpush1.bf16.msra.mxu0 0
        %1219 = vmatprep.subr.bf16.mxu0 0
        %1220 = vmatpush1.bf16.msra.mxu0 0
        %1221 = vmatprep.subr.bf16.mxu0 0
        %1222 = vmatpush1.bf16.msra.mxu0 0
        %1223 = vmatprep.subr.bf16.mxu0 0
        %1224 = vmatpush1.bf16.msra.mxu0 0
        %1225 = vmatprep.subr.bf16.mxu0 0
        %1226 = vmatpush1.bf16.msra.mxu0 0
        %1227 = vmatprep.subr.bf16.mxu0 0
        %1228 = vmatpush1.bf16.msra.mxu0 0
        %1229 = vmatprep.subr.bf16.mxu0 0
        %1230 = vmatpush1.bf16.msra.mxu0 0
        %1231 = vmatprep.subr.bf16.mxu0 0
        %1232 = vmatpush1.bf16.msra.mxu0 0
        %1233 = vmatprep.mubr.bf16.mxu0 0
        %1234 = vmatmul.mubr.bf16.gmra.mrb[0].mxu0 %v1135
        %v1235 = vpop.f32.mrb[0].mxu0
        %v1236 = vadd.f32 0.0, %v1235
        %v1237 = vpop.f32.mrb[0].mxu0
        %v1238 = vpop.f32.mrb[0].mxu0
        %v1239 = vpop.f32.mrb[0].mxu0
        %1240 = vdwg.mxu0
        %v1257 = vunpack.c.l.b16 %v1074
        %v1258 = vunpack.c.l.b16 %v1075
        %v1259 = vunpack.c.l.b16 %v1076
        %v1260 = vunpack.c.l.b16 %v1077
        %v1261 = vunpack.c.l.b16 %v1078
        %v1262 = vunpack.c.l.b16 %v1079
        %v1263 = vunpack.c.l.b16 %v1080
        %v1264 = vunpack.c.l.b16 %v1081
        %v1265 = vunpack.c.l.b16 %v1082
        %v1266 = vunpack.c.l.b16 %v1083
        %v1267 = vunpack.c.l.b16 %v1084
        %v1268 = vunpack.c.l.b16 %v1085
        %v1269 = vunpack.c.l.b16 %v1086
        %v1270 = vunpack.c.l.b16 %v1087
        %v1271 = vunpack.c.l.b16 %v1088
        %v1272 = vunpack.c.l.b16 %v1089
        %v1273 = vpack.c.b16 %v1258, %v1257
        %v1274 = vpack.c.b16 %v1260, %v1259
        %v1275 = vpack.c.b16 %v1262, %v1261
        %v1276 = vpack.c.b16 %v1264, %v1263
        %v1277 = vpack.c.b16 %v1266, %v1265
        %v1278 = vpack.c.b16 %v1268, %v1267
        %v1279 = vpack.c.b16 %v1270, %v1269
        %v1280 = vpack.c.b16 %v1272, %v1271
        %1289 = vmatprep.subr.bf16.mxu0 0
        %1290 = vmatpush1.bf16.msra.mxu0 %v1273
        %1291 = vmatprep.subr.bf16.mxu0 0
        %1292 = vmatpush1.bf16.msra.mxu0 %v1274
        %1293 = vmatprep.subr.bf16.mxu0 0
        %1294 = vmatpush1.bf16.msra.mxu0 %v1275
        %1295 = vmatprep.subr.bf16.mxu0 0
        %1296 = vmatpush1.bf16.msra.mxu0 %v1276
        %1297 = vmatprep.subr.bf16.mxu0 0
        %1298 = vmatpush1.bf16.msra.mxu0 %v1277
        %1299 = vmatprep.subr.bf16.mxu0 0
        %1300 = vmatpush1.bf16.msra.mxu0 %v1278
        %1301 = vmatprep.subr.bf16.mxu0 0
        %1302 = vmatpush1.bf16.msra.mxu0 %v1279
        %1303 = vmatprep.subr.bf16.mxu0 0
        %1304 = vmatpush1.bf16.msra.mxu0 %v1280
        %1305 = vmatprep.subr.bf16.mxu0 0
        %1306 = vmatpush1.bf16.msra.mxu0 0
        %1307 = vmatprep.subr.bf16.mxu0 0
        %1308 = vmatpush1.bf16.msra.mxu0 0
        %1309 = vmatprep.subr.bf16.mxu0 0
        %1310 = vmatpush1.bf16.msra.mxu0 0
        %1311 = vmatprep.subr.bf16.mxu0 0
        %1312 = vmatpush1.bf16.msra.mxu0 0
        %1313 = vmatprep.subr.bf16.mxu0 0
        %1314 = vmatpush1.bf16.msra.mxu0 0
        %1315 = vmatprep.subr.bf16.mxu0 0
        %1316 = vmatpush1.bf16.msra.mxu0 0
        %1317 = vmatprep.subr.bf16.mxu0 0
        %1318 = vmatpush1.bf16.msra.mxu0 0
        %1319 = vmatprep.subr.bf16.mxu0 0
        %1320 = vmatpush1.bf16.msra.mxu0 0
        %1321 = vmatprep.mubr.bf16.mxu0 0
        %1322 = vmatmul.mubr.bf16.gmra.mrb[0].mxu0 %v1073
        %v1323 = vpop.f32.mrb[0].mxu0
        %v1324 = vadd.f32 %v1236, %v1323
        %v1325 = vpop.f32.mrb[0].mxu0
        %v1326 = vpop.f32.mrb[0].mxu0
        %v1327 = vpop.f32.mrb[0].mxu0
        %1328 = vdwg.mxu0
        %s1329 = scalar_lea.vmem %s4, 8
        %v1330 = vld [vmem:[%s1329] sm:$0xf]
        %v1332 = vsel %vm1029, %v1330, 0
        %1334 = vmatprep.subr.bf16.mxu0 0
        %1335 = vmatpush1.bf16.msra.mxu0 %v1027
        %1336 = vmatprep.subr.bf16.mxu0 0
        %1337 = vmatpush1.bf16.msra.mxu0 0
        %1338 = vmatprep.subr.bf16.mxu0 0
        %1339 = vmatpush1.bf16.msra.mxu0 0
        %1340 = vmatprep.subr.bf16.mxu0 0
        %1341 = vmatpush1.bf16.msra.mxu0 0
        %1342 = vmatprep.subr.bf16.mxu0 0
        %1343 = vmatpush1.bf16.msra.mxu0 0
        %1344 = vmatprep.subr.bf16.mxu0 0
        %1345 = vmatpush1.bf16.msra.mxu0 0
        %1346 = vmatprep.subr.bf16.mxu0 0
        %1347 = vmatpush1.bf16.msra.mxu0 0
        %1348 = vmatprep.subr.bf16.mxu0 0
        %1349 = vmatpush1.bf16.msra.mxu0 0
        %1350 = vmatprep.subr.bf16.mxu0 0
        %1351 = vmatpush1.bf16.msra.mxu0 0
        %1352 = vmatprep.subr.bf16.mxu0 0
        %1353 = vmatpush1.bf16.msra.mxu0 0
        %1354 = vmatprep.subr.bf16.mxu0 0
        %1355 = vmatpush1.bf16.msra.mxu0 0
        %1356 = vmatprep.subr.bf16.mxu0 0
        %1357 = vmatpush1.bf16.msra.mxu0 0
        %1358 = vmatprep.subr.bf16.mxu0 0
        %1359 = vmatpush1.bf16.msra.mxu0 0
        %1360 = vmatprep.subr.bf16.mxu0 0
        %1361 = vmatpush1.bf16.msra.mxu0 0
        %1362 = vmatprep.subr.bf16.mxu0 0
        %1363 = vmatpush1.bf16.msra.mxu0 0
        %1364 = vmatprep.subr.bf16.mxu0 0
        %1365 = vmatpush1.bf16.msra.mxu0 0
        %1366 = vmatprep.mubr.bf16.mxu0 0
        %1367 = vmatmul.mubr.bf16.gmra.mrb[0].mxu0 %v1332
        %v1368 = vpop.f32.mrb[0].mxu0
        %v1369 = vadd.f32 0.0, %v1368
        %v1370 = vpop.f32.mrb[0].mxu0
        %v1371 = vpop.f32.mrb[0].mxu0
        %v1372 = vpop.f32.mrb[0].mxu0
        %1373 = vdwg.mxu0
        %v1374 = vpack.c.bf16 %v1369, %v1369
        %s1375 = scalar_lea.vmem %s5, 128
        %v1376 = vld [vmem:[%s1375] sm:$0xf]
        %v1377 = vld [vmem:[%s1375 + $0x4] sm:$0xf]
        %v1378 = vld [vmem:[%s1375 + $0x8] sm:$0xf]
        %v1379 = vld [vmem:[%s1375 + $0xc] sm:$0xf]
        %v1380 = vld [vmem:[%s1375 + $0x10] sm:$0xf]
        %v1381 = vld [vmem:[%s1375 + $0x14] sm:$0xf]
        %v1382 = vld [vmem:[%s1375 + $0x18] sm:$0xf]
        %v1383 = vld [vmem:[%s1375 + $0x1c] sm:$0xf]
        %v1384 = vld [vmem:[%s1375 + $0x20] sm:$0xf]
        %v1385 = vld [vmem:[%s1375 + $0x24] sm:$0xf]
        %v1386 = vld [vmem:[%s1375 + $0x28] sm:$0xf]
        %v1387 = vld [vmem:[%s1375 + $0x2c] sm:$0xf]
        %v1388 = vld [vmem:[%s1375 + $0x30] sm:$0xf]
        %v1389 = vld [vmem:[%s1375 + $0x34] sm:$0xf]
        %v1390 = vld [vmem:[%s1375 + $0x38] sm:$0xf]
        %v1391 = vld [vmem:[%s1375 + $0x3c] sm:$0xf]
        %v1408 = vunpack.c.l.b16 %v1376
        %v1409 = vunpack.c.l.b16 %v1377
        %v1410 = vunpack.c.l.b16 %v1378
        %v1411 = vunpack.c.l.b16 %v1379
        %v1412 = vunpack.c.l.b16 %v1380
        %v1413 = vunpack.c.l.b16 %v1381
        %v1414 = vunpack.c.l.b16 %v1382
        %v1415 = vunpack.c.l.b16 %v1383
        %v1416 = vunpack.c.l.b16 %v1384
        %v1417 = vunpack.c.l.b16 %v1385
        %v1418 = vunpack.c.l.b16 %v1386
        %v1419 = vunpack.c.l.b16 %v1387
        %v1420 = vunpack.c.l.b16 %v1388
        %v1421 = vunpack.c.l.b16 %v1389
        %v1422 = vunpack.c.l.b16 %v1390
        %v1423 = vunpack.c.l.b16 %v1391
        %v1424 = vpack.c.b16 %v1409, %v1408
        %v1425 = vpack.c.b16 %v1411, %v1410
        %v1426 = vpack.c.b16 %v1413, %v1412
        %v1427 = vpack.c.b16 %v1415, %v1414
        %v1428 = vpack.c.b16 %v1417, %v1416
        %v1429 = vpack.c.b16 %v1419, %v1418
        %v1430 = vpack.c.b16 %v1421, %v1420
        %v1431 = vpack.c.b16 %v1423, %v1422
        %1440 = vmatprep.subr.bf16.mxu0 0
        %1441 = vmatpush1.bf16.msra.mxu0 %v1424
        %1442 = vmatprep.subr.bf16.mxu0 0
        %1443 = vmatpush1.bf16.msra.mxu0 %v1425
        %1444 = vmatprep.subr.bf16.mxu0 0
        %1445 = vmatpush1.bf16.msra.mxu0 %v1426
        %1446 = vmatprep.subr.bf16.mxu0 0
        %1447 = vmatpush1.bf16.msra.mxu0 %v1427
        %1448 = vmatprep.subr.bf16.mxu0 0
        %1449 = vmatpush1.bf16.msra.mxu0 %v1428
        %1450 = vmatprep.subr.bf16.mxu0 0
        %1451 = vmatpush1.bf16.msra.mxu0 %v1429
        %1452 = vmatprep.subr.bf16.mxu0 0
        %1453 = vmatpush1.bf16.msra.mxu0 %v1430
        %1454 = vmatprep.subr.bf16.mxu0 0
        %1455 = vmatpush1.bf16.msra.mxu0 %v1431
        %1456 = vmatprep.subr.bf16.mxu0 0
        %1457 = vmatpush1.bf16.msra.mxu0 0
        %1458 = vmatprep.subr.bf16.mxu0 0
        %1459 = vmatpush1.bf16.msra.mxu0 0
        %1460 = vmatprep.subr.bf16.mxu0 0
        %1461 = vmatpush1.bf16.msra.mxu0 0
        %1462 = vmatprep.subr.bf16.mxu0 0
        %1463 = vmatpush1.bf16.msra.mxu0 0
        %1464 = vmatprep.subr.bf16.mxu0 0
        %1465 = vmatpush1.bf16.msra.mxu0 0
        %1466 = vmatprep.subr.bf16.mxu0 0
        %1467 = vmatpush1.bf16.msra.mxu0 0
        %1468 = vmatprep.subr.bf16.mxu0 0
        %1469 = vmatpush1.bf16.msra.mxu0 0
        %1470 = vmatprep.subr.bf16.mxu0 0
        %1471 = vmatpush1.bf16.msra.mxu0 0
        %1472 = vmatprep.mubr.bf16.mxu0 0
        %1473 = vmatmul.mubr.bf16.gmra.mrb[0].mxu0 %v1374
        %v1474 = vpop.f32.mrb[0].mxu0
        %v1475 = vadd.f32 0.0, %v1474
        %v1476 = vpop.f32.mrb[0].mxu0
        %v1477 = vpop.f32.mrb[0].mxu0
        %v1478 = vpop.f32.mrb[0].mxu0
        %1479 = vdwg.mxu0
        %v1480 = vadd.f32 %v1324, %v1475
        %s1481 = scalar_lea.vmem %s4, 12
        %v1482 = vld [vmem:[%s1481] sm:$0xf]
        %v1484 = vsel %vm1029, %v1482, 0
        %1486 = vmatprep.subr.bf16.mxu0 0
        %1487 = vmatpush1.bf16.msra.mxu0 %v1027
        %1488 = vmatprep.subr.bf16.mxu0 0
        %1489 = vmatpush1.bf16.msra.mxu0 0
        %1490 = vmatprep.subr.bf16.mxu0 0
        %1491 = vmatpush1.bf16.msra.mxu0 0
        %1492 = vmatprep.subr.bf16.mxu0 0
        %1493 = vmatpush1.bf16.msra.mxu0 0
        %1494 = vmatprep.subr.bf16.mxu0 0
        %1495 = vmatpush1.bf16.msra.mxu0 0
        %1496 = vmatprep.subr.bf16.mxu0 0
        %1497 = vmatpush1.bf16.msra.mxu0 0
        %1498 = vmatprep.subr.bf16.mxu0 0
        %1499 = vmatpush1.bf16.msra.mxu0 0
        %1500 = vmatprep.subr.bf16.mxu0 0
        %1501 = vmatpush1.bf16.msra.mxu0 0
        %1502 = vmatprep.subr.bf16.mxu0 0
        %1503 = vmatpush1.bf16.msra.mxu0 0
        %1504 = vmatprep.subr.bf16.mxu0 0
        %1505 = vmatpush1.bf16.msra.mxu0 0
        %1506 = vmatprep.subr.bf16.mxu0 0
        %1507 = vmatpush1.bf16.msra.mxu0 0
        %1508 = vmatprep.subr.bf16.mxu0 0
        %1509 = vmatpush1.bf16.msra.mxu0 0
        %1510 = vmatprep.subr.bf16.mxu0 0
        %1511 = vmatpush1.bf16.msra.mxu0 0
        %1512 = vmatprep.subr.bf16.mxu0 0
        %1513 = vmatpush1.bf16.msra.mxu0 0
        %1514 = vmatprep.subr.bf16.mxu0 0
        %1515 = vmatpush1.bf16.msra.mxu0 0
        %1516 = vmatprep.subr.bf16.mxu0 0
        %1517 = vmatpush1.bf16.msra.mxu0 0
        %1518 = vmatprep.mubr.bf16.mxu0 0
        %1519 = vmatmul.mubr.bf16.gmra.mrb[0].mxu0 %v1484
        %v1520 = vpop.f32.mrb[0].mxu0
        %v1521 = vadd.f32 0.0, %v1520
        %v1522 = vpop.f32.mrb[0].mxu0
        %v1523 = vpop.f32.mrb[0].mxu0
        %v1524 = vpop.f32.mrb[0].mxu0
        %1525 = vdwg.mxu0
        %v1526 = vpack.c.bf16 %v1521, %v1521
        %s1527 = scalar_lea.vmem %s5, 192
        %v1528 = vld [vmem:[%s1527] sm:$0xf]
        %v1529 = vld [vmem:[%s1527 + $0x4] sm:$0xf]
        %v1530 = vld [vmem:[%s1527 + $0x8] sm:$0xf]
        %v1531 = vld [vmem:[%s1527 + $0xc] sm:$0xf]
        %v1532 = vld [vmem:[%s1527 + $0x10] sm:$0xf]
        %v1533 = vld [vmem:[%s1527 + $0x14] sm:$0xf]
        %v1534 = vld [vmem:[%s1527 + $0x18] sm:$0xf]
        %v1535 = vld [vmem:[%s1527 + $0x1c] sm:$0xf]
        %v1536 = vld [vmem:[%s1527 + $0x20] sm:$0xf]
        %v1537 = vld [vmem:[%s1527 + $0x24] sm:$0xf]
        %v1538 = vld [vmem:[%s1527 + $0x28] sm:$0xf]
        %v1539 = vld [vmem:[%s1527 + $0x2c] sm:$0xf]
        %v1540 = vld [vmem:[%s1527 + $0x30] sm:$0xf]
        %v1541 = vld [vmem:[%s1527 + $0x34] sm:$0xf]
        %v1542 = vld [vmem:[%s1527 + $0x38] sm:$0xf]
        %v1543 = vld [vmem:[%s1527 + $0x3c] sm:$0xf]
        %v1560 = vunpack.c.l.b16 %v1528
        %v1561 = vunpack.c.l.b16 %v1529
        %v1562 = vunpack.c.l.b16 %v1530
        %v1563 = vunpack.c.l.b16 %v1531
        %v1564 = vunpack.c.l.b16 %v1532
        %v1565 = vunpack.c.l.b16 %v1533
        %v1566 = vunpack.c.l.b16 %v1534
        %v1567 = vunpack.c.l.b16 %v1535
        %v1568 = vunpack.c.l.b16 %v1536
        %v1569 = vunpack.c.l.b16 %v1537
        %v1570 = vunpack.c.l.b16 %v1538
        %v1571 = vunpack.c.l.b16 %v1539
        %v1572 = vunpack.c.l.b16 %v1540
        %v1573 = vunpack.c.l.b16 %v1541
        %v1574 = vunpack.c.l.b16 %v1542
        %v1575 = vunpack.c.l.b16 %v1543
        %v1576 = vpack.c.b16 %v1561, %v1560
        %v1577 = vpack.c.b16 %v1563, %v1562
        %v1578 = vpack.c.b16 %v1565, %v1564
        %v1579 = vpack.c.b16 %v1567, %v1566
        %v1580 = vpack.c.b16 %v1569, %v1568
        %v1581 = vpack.c.b16 %v1571, %v1570
        %v1582 = vpack.c.b16 %v1573, %v1572
        %v1583 = vpack.c.b16 %v1575, %v1574
        %1592 = vmatprep.subr.bf16.mxu0 0
        %1593 = vmatpush1.bf16.msra.mxu0 %v1576
        %1594 = vmatprep.subr.bf16.mxu0 0
        %1595 = vmatpush1.bf16.msra.mxu0 %v1577
        %1596 = vmatprep.subr.bf16.mxu0 0
        %1597 = vmatpush1.bf16.msra.mxu0 %v1578
        %1598 = vmatprep.subr.bf16.mxu0 0
        %1599 = vmatpush1.bf16.msra.mxu0 %v1579
        %1600 = vmatprep.subr.bf16.mxu0 0
        %1601 = vmatpush1.bf16.msra.mxu0 %v1580
        %1602 = vmatprep.subr.bf16.mxu0 0
        %1603 = vmatpush1.bf16.msra.mxu0 %v1581
        %1604 = vmatprep.subr.bf16.mxu0 0
        %1605 = vmatpush1.bf16.msra.mxu0 %v1582
        %1606 = vmatprep.subr.bf16.mxu0 0
        %1607 = vmatpush1.bf16.msra.mxu0 %v1583
        %1608 = vmatprep.subr.bf16.mxu0 0
        %1609 = vmatpush1.bf16.msra.mxu0 0
        %1610 = vmatprep.subr.bf16.mxu0 0
        %1611 = vmatpush1.bf16.msra.mxu0 0
        %1612 = vmatprep.subr.bf16.mxu0 0
        %1613 = vmatpush1.bf16.msra.mxu0 0
        %1614 = vmatprep.subr.bf16.mxu0 0
        %1615 = vmatpush1.bf16.msra.mxu0 0
        %1616 = vmatprep.subr.bf16.mxu0 0
        %1617 = vmatpush1.bf16.msra.mxu0 0
        %1618 = vmatprep.subr.bf16.mxu0 0
        %1619 = vmatpush1.bf16.msra.mxu0 0
        %1620 = vmatprep.subr.bf16.mxu0 0
        %1621 = vmatpush1.bf16.msra.mxu0 0
        %1622 = vmatprep.subr.bf16.mxu0 0
        %1623 = vmatpush1.bf16.msra.mxu0 0
        %1624 = vmatprep.mubr.bf16.mxu0 0
        %1625 = vmatmul.mubr.bf16.gmra.mrb[0].mxu0 %v1526
        %v1626 = vpop.f32.mrb[0].mxu0
        %v1627 = vadd.f32 0.0, %v1626
        %v1628 = vpop.f32.mrb[0].mxu0
        %v1629 = vpop.f32.mrb[0].mxu0
        %v1630 = vpop.f32.mrb[0].mxu0
        %1631 = vdwg.mxu0
        %v1632 = vadd.f32 %v1480, %v1627
        %v1633 = vld [vmem:[%s6] sm:$0x1]
        %v1635 = vlaneseq
        %v1636 = vshrl.u32 %v1635, 7
        %v1637 = vsub.s32 0, %v1636
        %v1638 = vrot.slane %v1633, %v1637
        %v1640 = vadd.f32 %v1632, %v1638
        %v1641 = vmax.f32 %v1640, 0.0
        %v1642 = vpack.c.bf16 %v1641, %v1641
        %v1643 = vld [vmem:[%s7] sm:$0x3]
        %vm1644 = vcmask 64512
        %v1646 = vsel %vm1644, %v1643, 0
        %vm1648 = vcmask 1043456
        %v1650 = vsel %vm1648, %v1642, 0
        %1652 = vmatprep.subr.bf16.mxu0 0
        %1653 = vmatpush1.bf16.msra.mxu0 %v1650
        %1654 = vmatprep.subr.bf16.mxu0 0
        %1655 = vmatpush1.bf16.msra.mxu0 0
        %1656 = vmatprep.subr.bf16.mxu0 0
        %1657 = vmatpush1.bf16.msra.mxu0 0
        %1658 = vmatprep.subr.bf16.mxu0 0
        %1659 = vmatpush1.bf16.msra.mxu0 0
        %1660 = vmatprep.subr.bf16.mxu0 0
        %1661 = vmatpush1.bf16.msra.mxu0 0
        %1662 = vmatprep.subr.bf16.mxu0 0
        %1663 = vmatpush1.bf16.msra.mxu0 0
        %1664 = vmatprep.subr.bf16.mxu0 0
        %1665 = vmatpush1.bf16.msra.mxu0 0
        %1666 = vmatprep.subr.bf16.mxu0 0
        %1667 = vmatpush1.bf16.msra.mxu0 0
        %1668 = vmatprep.subr.bf16.mxu0 0
        %1669 = vmatpush1.bf16.msra.mxu0 0
        %1670 = vmatprep.subr.bf16.mxu0 0
        %1671 = vmatpush1.bf16.msra.mxu0 0
        %1672 = vmatprep.subr.bf16.mxu0 0
        %1673 = vmatpush1.bf16.msra.mxu0 0
        %1674 = vmatprep.subr.bf16.mxu0 0
        %1675 = vmatpush1.bf16.msra.mxu0 0
        %1676 = vmatprep.subr.bf16.mxu0 0
        %1677 = vmatpush1.bf16.msra.mxu0 0
        %1678 = vmatprep.subr.bf16.mxu0 0
        %1679 = vmatpush1.bf16.msra.mxu0 0
        %1680 = vmatprep.subr.bf16.mxu0 0
        %1681 = vmatpush1.bf16.msra.mxu0 0
        %1682 = vmatprep.subr.bf16.mxu0 0
        %1683 = vmatpush1.bf16.msra.mxu0 0
        %1684 = vmatprep.mubr.bf16.mxu0 0
        %1685 = vmatmul.mubr.bf16.gmra.mrb[0].mxu0 %v1646
        %v1686 = vpop.f32.mrb[0].mxu0
        %v1687 = vadd.f32 0.0, %v1686
        %v1688 = vpop.f32.mrb[0].mxu0
        %v1689 = vpop.f32.mrb[0].mxu0
        %v1690 = vpop.f32.mrb[0].mxu0
        %1691 = vdwg.mxu0
        %v1692 = vpack.c.bf16 %v1687, %v1687
        %v1693 = vld [vmem:[%s8] sm:$0xf]
        %v1694 = vld [vmem:[%s8 + $0x4] sm:$0xf]
        %v1695 = vld [vmem:[%s8 + $0x8] sm:$0xf]
        %v1696 = vld [vmem:[%s8 + $0xc] sm:$0xf]
        %v1697 = vld [vmem:[%s8 + $0x10] sm:$0xf]
        %v1698 = vld [vmem:[%s8 + $0x14] sm:$0xf]
        %v1699 = vld [vmem:[%s8 + $0x18] sm:$0xf]
        %v1700 = vld [vmem:[%s8 + $0x1c] sm:$0xf]
        %v1701 = vld [vmem:[%s8 + $0x20] sm:$0xf]
        %v1702 = vld [vmem:[%s8 + $0x24] sm:$0xf]
        %v1703 = vld [vmem:[%s8 + $0x28] sm:$0xf]
        %v1704 = vld [vmem:[%s8 + $0x2c] sm:$0xf]
        %v1705 = vld [vmem:[%s8 + $0x30] sm:$0xf]
        %v1706 = vld [vmem:[%s8 + $0x34] sm:$0xf]
        %v1707 = vld [vmem:[%s8 + $0x38] sm:$0xf]
        %v1708 = vld [vmem:[%s8 + $0x3c] sm:$0xf]
        %s1709 = scalar_lea.vmem %s7, 2
        %v1710 = vld [vmem:[%s1709] sm:$0x3]
        %v1712 = vsel %vm1644, %v1710, 0
        %1714 = vmatprep.subr.bf16.mxu0 0
        %1715 = vmatpush1.bf16.msra.mxu0 %v1650
        %1716 = vmatprep.subr.bf16.mxu0 0
        %1717 = vmatpush1.bf16.msra.mxu0 0
        %1718 = vmatprep.subr.bf16.mxu0 0
        %1719 = vmatpush1.bf16.msra.mxu0 0
        %1720 = vmatprep.subr.bf16.mxu0 0
        %1721 = vmatpush1.bf16.msra.mxu0 0
        %1722 = vmatprep.subr.bf16.mxu0 0
        %1723 = vmatpush1.bf16.msra.mxu0 0
        %1724 = vmatprep.subr.bf16.mxu0 0
        %1725 = vmatpush1.bf16.msra.mxu0 0
        %1726 = vmatprep.subr.bf16.mxu0 0
        %1727 = vmatpush1.bf16.msra.mxu0 0
        %1728 = vmatprep.subr.bf16.mxu0 0
        %1729 = vmatpush1.bf16.msra.mxu0 0
        %1730 = vmatprep.subr.bf16.mxu0 0
        %1731 = vmatpush1.bf16.msra.mxu0 0
        %1732 = vmatprep.subr.bf16.mxu0 0
        %1733 = vmatpush1.bf16.msra.mxu0 0
        %1734 = vmatprep.subr.bf16.mxu0 0
        %1735 = vmatpush1.bf16.msra.mxu0 0
        %1736 = vmatprep.subr.bf16.mxu0 0
        %1737 = vmatpush1.bf16.msra.mxu0 0
        %1738 = vmatprep.subr.bf16.mxu0 0
        %1739 = vmatpush1.bf16.msra.mxu0 0
        %1740 = vmatprep.subr.bf16.mxu0 0
        %1741 = vmatpush1.bf16.msra.mxu0 0
        %1742 = vmatprep.subr.bf16.mxu0 0
        %1743 = vmatpush1.bf16.msra.mxu0 0
        %1744 = vmatprep.subr.bf16.mxu0 0
        %1745 = vmatpush1.bf16.msra.mxu0 0
        %1746 = vmatprep.mubr.bf16.mxu0 0
        %1747 = vmatmul.mubr.bf16.gmra.mrb[0].mxu0 %v1712
        %v1748 = vpop.f32.mrb[0].mxu0
        %v1749 = vadd.f32 0.0, %v1748
        %v1750 = vpop.f32.mrb[0].mxu0
        %v1751 = vpop.f32.mrb[0].mxu0
        %v1752 = vpop.f32.mrb[0].mxu0
        %1753 = vdwg.mxu0
        %v1754 = vpack.c.bf16 %v1749, %v1749
        %s1755 = scalar_lea.vmem %s8, 64
        %v1756 = vld [vmem:[%s1755] sm:$0xf]
        %v1757 = vld [vmem:[%s1755 + $0x4] sm:$0xf]
        %v1758 = vld [vmem:[%s1755 + $0x8] sm:$0xf]
        %v1759 = vld [vmem:[%s1755 + $0xc] sm:$0xf]
        %v1760 = vld [vmem:[%s1755 + $0x10] sm:$0xf]
        %v1761 = vld [vmem:[%s1755 + $0x14] sm:$0xf]
        %v1762 = vld [vmem:[%s1755 + $0x18] sm:$0xf]
        %v1763 = vld [vmem:[%s1755 + $0x1c] sm:$0xf]
        %v1764 = vld [vmem:[%s1755 + $0x20] sm:$0xf]
        %v1765 = vld [vmem:[%s1755 + $0x24] sm:$0xf]
        %v1766 = vld [vmem:[%s1755 + $0x28] sm:$0xf]
        %v1767 = vld [vmem:[%s1755 + $0x2c] sm:$0xf]
        %v1768 = vld [vmem:[%s1755 + $0x30] sm:$0xf]
        %v1769 = vld [vmem:[%s1755 + $0x34] sm:$0xf]
        %v1770 = vld [vmem:[%s1755 + $0x38] sm:$0xf]
        %v1771 = vld [vmem:[%s1755 + $0x3c] sm:$0xf]
        %v1788 = vunpack.c.l.b16 %v1756
        %v1789 = vunpack.c.l.b16 %v1757
        %v1790 = vunpack.c.l.b16 %v1758
        %v1791 = vunpack.c.l.b16 %v1759
        %v1792 = vunpack.c.l.b16 %v1760
        %v1793 = vunpack.c.l.b16 %v1761
        %v1794 = vunpack.c.l.b16 %v1762
        %v1795 = vunpack.c.l.b16 %v1763
        %v1796 = vunpack.c.l.b16 %v1764
        %v1797 = vunpack.c.l.b16 %v1765
        %v1798 = vunpack.c.l.b16 %v1766
        %v1799 = vunpack.c.l.b16 %v1767
        %v1800 = vunpack.c.l.b16 %v1768
        %v1801 = vunpack.c.l.b16 %v1769
        %v1802 = vunpack.c.l.b16 %v1770
        %v1803 = vunpack.c.l.b16 %v1771
        %v1804 = vpack.c.b16 %v1789, %v1788
        %v1805 = vpack.c.b16 %v1791, %v1790
        %v1806 = vpack.c.b16 %v1793, %v1792
        %v1807 = vpack.c.b16 %v1795, %v1794
        %v1808 = vpack.c.b16 %v1797, %v1796
        %v1809 = vpack.c.b16 %v1799, %v1798
        %v1810 = vpack.c.b16 %v1801, %v1800
        %v1811 = vpack.c.b16 %v1803, %v1802
        %1820 = vmatprep.subr.bf16.mxu0 0
        %1821 = vmatpush1.bf16.msra.mxu0 %v1804
        %1822 = vmatprep.subr.bf16.mxu0 0
        %1823 = vmatpush1.bf16.msra.mxu0 %v1805
        %1824 = vmatprep.subr.bf16.mxu0 0
        %1825 = vmatpush1.bf16.msra.mxu0 %v1806
        %1826 = vmatprep.subr.bf16.mxu0 0
        %1827 = vmatpush1.bf16.msra.mxu0 %v1807
        %1828 = vmatprep.subr.bf16.mxu0 0
        %1829 = vmatpush1.bf16.msra.mxu0 %v1808
        %1830 = vmatprep.subr.bf16.mxu0 0
        %1831 = vmatpush1.bf16.msra.mxu0 %v1809
        %1832 = vmatprep.subr.bf16.mxu0 0
        %1833 = vmatpush1.bf16.msra.mxu0 %v1810
        %1834 = vmatprep.subr.bf16.mxu0 0
        %1835 = vmatpush1.bf16.msra.mxu0 %v1811
        %1836 = vmatprep.subr.bf16.mxu0 0
        %1837 = vmatpush1.bf16.msra.mxu0 0
        %1838 = vmatprep.subr.bf16.mxu0 0
        %1839 = vmatpush1.bf16.msra.mxu0 0
        %1840 = vmatprep.subr.bf16.mxu0 0
        %1841 = vmatpush1.bf16.msra.mxu0 0
        %1842 = vmatprep.subr.bf16.mxu0 0
        %1843 = vmatpush1.bf16.msra.mxu0 0
        %1844 = vmatprep.subr.bf16.mxu0 0
        %1845 = vmatpush1.bf16.msra.mxu0 0
        %1846 = vmatprep.subr.bf16.mxu0 0
        %1847 = vmatpush1.bf16.msra.mxu0 0
        %1848 = vmatprep.subr.bf16.mxu0 0
        %1849 = vmatpush1.bf16.msra.mxu0 0
        %1850 = vmatprep.subr.bf16.mxu0 0
        %1851 = vmatpush1.bf16.msra.mxu0 0
        %1852 = vmatprep.mubr.bf16.mxu0 0
        %1853 = vmatmul.mubr.bf16.gmra.mrb[0].mxu0 %v1754
        %v1854 = vpop.f32.mrb[0].mxu0
        %v1855 = vadd.f32 0.0, %v1854
        %v1856 = vpop.f32.mrb[0].mxu0
        %v1857 = vpop.f32.mrb[0].mxu0
        %v1858 = vpop.f32.mrb[0].mxu0
        %1859 = vdwg.mxu0
        %v1876 = vunpack.c.l.b16 %v1693
        %v1877 = vunpack.c.l.b16 %v1694
        %v1878 = vunpack.c.l.b16 %v1695
        %v1879 = vunpack.c.l.b16 %v1696
        %v1880 = vunpack.c.l.b16 %v1697
        %v1881 = vunpack.c.l.b16 %v1698
        %v1882 = vunpack.c.l.b16 %v1699
        %v1883 = vunpack.c.l.b16 %v1700
        %v1884 = vunpack.c.l.b16 %v1701
        %v1885 = vunpack.c.l.b16 %v1702
        %v1886 = vunpack.c.l.b16 %v1703
        %v1887 = vunpack.c.l.b16 %v1704
        %v1888 = vunpack.c.l.b16 %v1705
        %v1889 = vunpack.c.l.b16 %v1706
        %v1890 = vunpack.c.l.b16 %v1707
        %v1891 = vunpack.c.l.b16 %v1708
        %v1892 = vpack.c.b16 %v1877, %v1876
        %v1893 = vpack.c.b16 %v1879, %v1878
        %v1894 = vpack.c.b16 %v1881, %v1880
        %v1895 = vpack.c.b16 %v1883, %v1882
        %v1896 = vpack.c.b16 %v1885, %v1884
        %v1897 = vpack.c.b16 %v1887, %v1886
        %v1898 = vpack.c.b16 %v1889, %v1888
        %v1899 = vpack.c.b16 %v1891, %v1890
        %1908 = vmatprep.subr.bf16.mxu0 0
        %1909 = vmatpush1.bf16.msra.mxu0 %v1892
        %1910 = vmatprep.subr.bf16.mxu0 0
        %1911 = vmatpush1.bf16.msra.mxu0 %v1893
        %1912 = vmatprep.subr.bf16.mxu0 0
        %1913 = vmatpush1.bf16.msra.mxu0 %v1894
        %1914 = vmatprep.subr.bf16.mxu0 0
        %1915 = vmatpush1.bf16.msra.mxu0 %v1895
        %1916 = vmatprep.subr.bf16.mxu0 0
        %1917 = vmatpush1.bf16.msra.mxu0 %v1896
        %1918 = vmatprep.subr.bf16.mxu0 0
        %1919 = vmatpush1.bf16.msra.mxu0 %v1897
        %1920 = vmatprep.subr.bf16.mxu0 0
        %1921 = vmatpush1.bf16.msra.mxu0 %v1898
        %1922 = vmatprep.subr.bf16.mxu0 0
        %1923 = vmatpush1.bf16.msra.mxu0 %v1899
        %1924 = vmatprep.subr.bf16.mxu0 0
        %1925 = vmatpush1.bf16.msra.mxu0 0
        %1926 = vmatprep.subr.bf16.mxu0 0
        %1927 = vmatpush1.bf16.msra.mxu0 0
        %1928 = vmatprep.subr.bf16.mxu0 0
        %1929 = vmatpush1.bf16.msra.mxu0 0
        %1930 = vmatprep.subr.bf16.mxu0 0
        %1931 = vmatpush1.bf16.msra.mxu0 0
        %1932 = vmatprep.subr.bf16.mxu0 0
        %1933 = vmatpush1.bf16.msra.mxu0 0
        %1934 = vmatprep.subr.bf16.mxu0 0
        %1935 = vmatpush1.bf16.msra.mxu0 0
        %1936 = vmatprep.subr.bf16.mxu0 0
        %1937 = vmatpush1.bf16.msra.mxu0 0
        %1938 = vmatprep.subr.bf16.mxu0 0
        %1939 = vmatpush1.bf16.msra.mxu0 0
        %1940 = vmatprep.mubr.bf16.mxu0 0
        %1941 = vmatmul.mubr.bf16.gmra.mrb[0].mxu0 %v1692
        %v1942 = vpop.f32.mrb[0].mxu0
        %v1943 = vadd.f32 %v1855, %v1942
        %v1944 = vpop.f32.mrb[0].mxu0
        %v1945 = vpop.f32.mrb[0].mxu0
        %v1946 = vpop.f32.mrb[0].mxu0
        %1947 = vdwg.mxu0
        %s1948 = scalar_lea.vmem %s7, 4
        %v1949 = vld [vmem:[%s1948] sm:$0x3]
        %v1951 = vsel %vm1644, %v1949, 0
        %1953 = vmatprep.subr.bf16.mxu0 0
        %1954 = vmatpush1.bf16.msra.mxu0 %v1650
        %1955 = vmatprep.subr.bf16.mxu0 0
        %1956 = vmatpush1.bf16.msra.mxu0 0
        %1957 = vmatprep.subr.bf16.mxu0 0
        %1958 = vmatpush1.bf16.msra.mxu0 0
        %1959 = vmatprep.subr.bf16.mxu0 0
        %1960 = vmatpush1.bf16.msra.mxu0 0
        %1961 = vmatprep.subr.bf16.mxu0 0
        %1962 = vmatpush1.bf16.msra.mxu0 0
        %1963 = vmatprep.subr.bf16.mxu0 0
        %1964 = vmatpush1.bf16.msra.mxu0 0
        %1965 = vmatprep.subr.bf16.mxu0 0
        %1966 = vmatpush1.bf16.msra.mxu0 0
        %1967 = vmatprep.subr.bf16.mxu0 0
        %1968 = vmatpush1.bf16.msra.mxu0 0
        %1969 = vmatprep.subr.bf16.mxu0 0
        %1970 = vmatpush1.bf16.msra.mxu0 0
        %1971 = vmatprep.subr.bf16.mxu0 0
        %1972 = vmatpush1.bf16.msra.mxu0 0
        %1973 = vmatprep.subr.bf16.mxu0 0
        %1974 = vmatpush1.bf16.msra.mxu0 0
        %1975 = vmatprep.subr.bf16.mxu0 0
        %1976 = vmatpush1.bf16.msra.mxu0 0
        %1977 = vmatprep.subr.bf16.mxu0 0
        %1978 = vmatpush1.bf16.msra.mxu0 0
        %1979 = vmatprep.subr.bf16.mxu0 0
        %1980 = vmatpush1.bf16.msra.mxu0 0
        %1981 = vmatprep.subr.bf16.mxu0 0
        %1982 = vmatpush1.bf16.msra.mxu0 0
        %1983 = vmatprep.subr.bf16.mxu0 0
        %1984 = vmatpush1.bf16.msra.mxu0 0
        %1985 = vmatprep.mubr.bf16.mxu0 0
        %1986 = vmatmul.mubr.bf16.gmra.mrb[0].mxu0 %v1951
        %v1987 = vpop.f32.mrb[0].mxu0
        %v1988 = vadd.f32 0.0, %v1987
        %v1989 = vpop.f32.mrb[0].mxu0
        %v1990 = vpop.f32.mrb[0].mxu0
        %v1991 = vpop.f32.mrb[0].mxu0
        %1992 = vdwg.mxu0
        %v1993 = vpack.c.bf16 %v1988, %v1988
        %s1994 = scalar_lea.vmem %s8, 128
        %v1995 = vld [vmem:[%s1994] sm:$0xf]
        %v1996 = vld [vmem:[%s1994 + $0x4] sm:$0xf]
        %v1997 = vld [vmem:[%s1994 + $0x8] sm:$0xf]
        %v1998 = vld [vmem:[%s1994 + $0xc] sm:$0xf]
        %v1999 = vld [vmem:[%s1994 + $0x10] sm:$0xf]
        %v2000 = vld [vmem:[%s1994 + $0x14] sm:$0xf]
        %v2001 = vld [vmem:[%s1994 + $0x18] sm:$0xf]
        %v2002 = vld [vmem:[%s1994 + $0x1c] sm:$0xf]
        %v2003 = vld [vmem:[%s1994 + $0x20] sm:$0xf]
        %v2004 = vld [vmem:[%s1994 + $0x24] sm:$0xf]
        %v2005 = vld [vmem:[%s1994 + $0x28] sm:$0xf]
        %v2006 = vld [vmem:[%s1994 + $0x2c] sm:$0xf]
        %v2007 = vld [vmem:[%s1994 + $0x30] sm:$0xf]
        %v2008 = vld [vmem:[%s1994 + $0x34] sm:$0xf]
        %v2009 = vld [vmem:[%s1994 + $0x38] sm:$0xf]
        %v2010 = vld [vmem:[%s1994 + $0x3c] sm:$0xf]
        %v2027 = vunpack.c.l.b16 %v1995
        %v2028 = vunpack.c.l.b16 %v1996
        %v2029 = vunpack.c.l.b16 %v1997
        %v2030 = vunpack.c.l.b16 %v1998
        %v2031 = vunpack.c.l.b16 %v1999
        %v2032 = vunpack.c.l.b16 %v2000
        %v2033 = vunpack.c.l.b16 %v2001
        %v2034 = vunpack.c.l.b16 %v2002
        %v2035 = vunpack.c.l.b16 %v2003
        %v2036 = vunpack.c.l.b16 %v2004
        %v2037 = vunpack.c.l.b16 %v2005
        %v2038 = vunpack.c.l.b16 %v2006
        %v2039 = vunpack.c.l.b16 %v2007
        %v2040 = vunpack.c.l.b16 %v2008
        %v2041 = vunpack.c.l.b16 %v2009
        %v2042 = vunpack.c.l.b16 %v2010
        %v2043 = vpack.c.b16 %v2028, %v2027
        %v2044 = vpack.c.b16 %v2030, %v2029
        %v2045 = vpack.c.b16 %v2032, %v2031
        %v2046 = vpack.c.b16 %v2034, %v2033
        %v2047 = vpack.c.b16 %v2036, %v2035
        %v2048 = vpack.c.b16 %v2038, %v2037
        %v2049 = vpack.c.b16 %v2040, %v2039
        %v2050 = vpack.c.b16 %v2042, %v2041
        %2059 = vmatprep.subr.bf16.mxu0 0
        %2060 = vmatpush1.bf16.msra.mxu0 %v2043
        %2061 = vmatprep.subr.bf16.mxu0 0
        %2062 = vmatpush1.bf16.msra.mxu0 %v2044
        %2063 = vmatprep.subr.bf16.mxu0 0
        %2064 = vmatpush1.bf16.msra.mxu0 %v2045
        %2065 = vmatprep.subr.bf16.mxu0 0
        %2066 = vmatpush1.bf16.msra.mxu0 %v2046
        %2067 = vmatprep.subr.bf16.mxu0 0
        %2068 = vmatpush1.bf16.msra.mxu0 %v2047
        %2069 = vmatprep.subr.bf16.mxu0 0
        %2070 = vmatpush1.bf16.msra.mxu0 %v2048
        %2071 = vmatprep.subr.bf16.mxu0 0
        %2072 = vmatpush1.bf16.msra.mxu0 %v2049
        %2073 = vmatprep.subr.bf16.mxu0 0
        %2074 = vmatpush1.bf16.msra.mxu0 %v2050
        %2075 = vmatprep.subr.bf16.mxu0 0
        %2076 = vmatpush1.bf16.msra.mxu0 0
        %2077 = vmatprep.subr.bf16.mxu0 0
        %2078 = vmatpush1.bf16.msra.mxu0 0
        %2079 = vmatprep.subr.bf16.mxu0 0
        %2080 = vmatpush1.bf16.msra.mxu0 0
        %2081 = vmatprep.subr.bf16.mxu0 0
        %2082 = vmatpush1.bf16.msra.mxu0 0
        %2083 = vmatprep.subr.bf16.mxu0 0
        %2084 = vmatpush1.bf16.msra.mxu0 0
        %2085 = vmatprep.subr.bf16.mxu0 0
        %2086 = vmatpush1.bf16.msra.mxu0 0
        %2087 = vmatprep.subr.bf16.mxu0 0
        %2088 = vmatpush1.bf16.msra.mxu0 0
        %2089 = vmatprep.subr.bf16.mxu0 0
        %2090 = vmatpush1.bf16.msra.mxu0 0
        %2091 = vmatprep.mubr.bf16.mxu0 0
        %2092 = vmatmul.mubr.bf16.gmra.mrb[0].mxu0 %v1993
        %v2093 = vpop.f32.mrb[0].mxu0
        %v2094 = vadd.f32 0.0, %v2093
        %v2095 = vpop.f32.mrb[0].mxu0
        %v2096 = vpop.f32.mrb[0].mxu0
        %v2097 = vpop.f32.mrb[0].mxu0
        %2098 = vdwg.mxu0
        %v2099 = vadd.f32 %v1943, %v2094
        %s2100 = scalar_lea.vmem %s7, 6
        %v2101 = vld [vmem:[%s2100] sm:$0x3]
        %v2103 = vsel %vm1644, %v2101, 0
        %2105 = vmatprep.subr.bf16.mxu0 0
        %2106 = vmatpush1.bf16.msra.mxu0 %v1650
        %2107 = vmatprep.subr.bf16.mxu0 0
        %2108 = vmatpush1.bf16.msra.mxu0 0
        %2109 = vmatprep.subr.bf16.mxu0 0
        %2110 = vmatpush1.bf16.msra.mxu0 0
        %2111 = vmatprep.subr.bf16.mxu0 0
        %2112 = vmatpush1.bf16.msra.mxu0 0
        %2113 = vmatprep.subr.bf16.mxu0 0
        %2114 = vmatpush1.bf16.msra.mxu0 0
        %2115 = vmatprep.subr.bf16.mxu0 0
        %2116 = vmatpush1.bf16.msra.mxu0 0
        %2117 = vmatprep.subr.bf16.mxu0 0
        %2118 = vmatpush1.bf16.msra.mxu0 0
        %2119 = vmatprep.subr.bf16.mxu0 0
        %2120 = vmatpush1.bf16.msra.mxu0 0
        %2121 = vmatprep.subr.bf16.mxu0 0
        %2122 = vmatpush1.bf16.msra.mxu0 0
        %2123 = vmatprep.subr.bf16.mxu0 0
        %2124 = vmatpush1.bf16.msra.mxu0 0
        %2125 = vmatprep.subr.bf16.mxu0 0
        %2126 = vmatpush1.bf16.msra.mxu0 0
        %2127 = vmatprep.subr.bf16.mxu0 0
        %2128 = vmatpush1.bf16.msra.mxu0 0
        %2129 = vmatprep.subr.bf16.mxu0 0
        %2130 = vmatpush1.bf16.msra.mxu0 0
        %2131 = vmatprep.subr.bf16.mxu0 0
        %2132 = vmatpush1.bf16.msra.mxu0 0
        %2133 = vmatprep.subr.bf16.mxu0 0
        %2134 = vmatpush1.bf16.msra.mxu0 0
        %2135 = vmatprep.subr.bf16.mxu0 0
        %2136 = vmatpush1.bf16.msra.mxu0 0
        %2137 = vmatprep.mubr.bf16.mxu0 0
        %2138 = vmatmul.mubr.bf16.gmra.mrb[0].mxu0 %v2103
        %v2139 = vpop.f32.mrb[0].mxu0
        %v2140 = vadd.f32 0.0, %v2139
        %v2141 = vpop.f32.mrb[0].mxu0
        %v2142 = vpop.f32.mrb[0].mxu0
        %v2143 = vpop.f32.mrb[0].mxu0
        %2144 = vdwg.mxu0
        %v2145 = vpack.c.bf16 %v2140, %v2140
        %s2146 = scalar_lea.vmem %s8, 192
        %v2147 = vld [vmem:[%s2146] sm:$0xf]
        %v2148 = vld [vmem:[%s2146 + $0x4] sm:$0xf]
        %v2149 = vld [vmem:[%s2146 + $0x8] sm:$0xf]
        %v2150 = vld [vmem:[%s2146 + $0xc] sm:$0xf]
        %v2151 = vld [vmem:[%s2146 + $0x10] sm:$0xf]
        %v2152 = vld [vmem:[%s2146 + $0x14] sm:$0xf]
        %v2153 = vld [vmem:[%s2146 + $0x18] sm:$0xf]
        %v2154 = vld [vmem:[%s2146 + $0x1c] sm:$0xf]
        %v2155 = vld [vmem:[%s2146 + $0x20] sm:$0xf]
        %v2156 = vld [vmem:[%s2146 + $0x24] sm:$0xf]
        %v2157 = vld [vmem:[%s2146 + $0x28] sm:$0xf]
        %v2158 = vld [vmem:[%s2146 + $0x2c] sm:$0xf]
        %v2159 = vld [vmem:[%s2146 + $0x30] sm:$0xf]
        %v2160 = vld [vmem:[%s2146 + $0x34] sm:$0xf]
        %v2161 = vld [vmem:[%s2146 + $0x38] sm:$0xf]
        %v2162 = vld [vmem:[%s2146 + $0x3c] sm:$0xf]
        %v2179 = vunpack.c.l.b16 %v2147
        %v2180 = vunpack.c.l.b16 %v2148
        %v2181 = vunpack.c.l.b16 %v2149
        %v2182 = vunpack.c.l.b16 %v2150
        %v2183 = vunpack.c.l.b16 %v2151
        %v2184 = vunpack.c.l.b16 %v2152
        %v2185 = vunpack.c.l.b16 %v2153
        %v2186 = vunpack.c.l.b16 %v2154
        %v2187 = vunpack.c.l.b16 %v2155
        %v2188 = vunpack.c.l.b16 %v2156
        %v2189 = vunpack.c.l.b16 %v2157
        %v2190 = vunpack.c.l.b16 %v2158
        %v2191 = vunpack.c.l.b16 %v2159
        %v2192 = vunpack.c.l.b16 %v2160
        %v2193 = vunpack.c.l.b16 %v2161
        %v2194 = vunpack.c.l.b16 %v2162
        %v2195 = vpack.c.b16 %v2180, %v2179
        %v2196 = vpack.c.b16 %v2182, %v2181
        %v2197 = vpack.c.b16 %v2184, %v2183
        %v2198 = vpack.c.b16 %v2186, %v2185
        %v2199 = vpack.c.b16 %v2188, %v2187
        %v2200 = vpack.c.b16 %v2190, %v2189
        %v2201 = vpack.c.b16 %v2192, %v2191
        %v2202 = vpack.c.b16 %v2194, %v2193
        %2211 = vmatprep.subr.bf16.mxu0 0
        %2212 = vmatpush1.bf16.msra.mxu0 %v2195
        %2213 = vmatprep.subr.bf16.mxu0 0
        %2214 = vmatpush1.bf16.msra.mxu0 %v2196
        %2215 = vmatprep.subr.bf16.mxu0 0
        %2216 = vmatpush1.bf16.msra.mxu0 %v2197
        %2217 = vmatprep.subr.bf16.mxu0 0
        %2218 = vmatpush1.bf16.msra.mxu0 %v2198
        %2219 = vmatprep.subr.bf16.mxu0 0
        %2220 = vmatpush1.bf16.msra.mxu0 %v2199
        %2221 = vmatprep.subr.bf16.mxu0 0
        %2222 = vmatpush1.bf16.msra.mxu0 %v2200
        %2223 = vmatprep.subr.bf16.mxu0 0
        %2224 = vmatpush1.bf16.msra.mxu0 %v2201
        %2225 = vmatprep.subr.bf16.mxu0 0
        %2226 = vmatpush1.bf16.msra.mxu0 %v2202
        %2227 = vmatprep.subr.bf16.mxu0 0
        %2228 = vmatpush1.bf16.msra.mxu0 0
        %2229 = vmatprep.subr.bf16.mxu0 0
        %2230 = vmatpush1.bf16.msra.mxu0 0
        %2231 = vmatprep.subr.bf16.mxu0 0
        %2232 = vmatpush1.bf16.msra.mxu0 0
        %2233 = vmatprep.subr.bf16.mxu0 0
        %2234 = vmatpush1.bf16.msra.mxu0 0
        %2235 = vmatprep.subr.bf16.mxu0 0
        %2236 = vmatpush1.bf16.msra.mxu0 0
        %2237 = vmatprep.subr.bf16.mxu0 0
        %2238 = vmatpush1.bf16.msra.mxu0 0
        %2239 = vmatprep.subr.bf16.mxu0 0
        %2240 = vmatpush1.bf16.msra.mxu0 0
        %2241 = vmatprep.subr.bf16.mxu0 0
        %2242 = vmatpush1.bf16.msra.mxu0 0
        %2243 = vmatprep.mubr.bf16.mxu0 0
        %2244 = vmatmul.mubr.bf16.gmra.mrb[0].mxu0 %v2145
        %v2245 = vpop.f32.mrb[0].mxu0
        %v2246 = vadd.f32 0.0, %v2245
        %v2247 = vpop.f32.mrb[0].mxu0
        %v2248 = vpop.f32.mrb[0].mxu0
        %v2249 = vpop.f32.mrb[0].mxu0
        %2250 = vdwg.mxu0
        %v2251 = vadd.f32 %v2099, %v2246
        %v2252 = vld [vmem:[%s9] sm:$0x1]
        %v2254 = vlaneseq
        %v2255 = vshrl.u32 %v2254, 7
        %v2256 = vsub.s32 0, %v2255
        %v2257 = vrot.slane %v2252, %v2256
        %v2259 = vadd.f32 %v2251, %v2257
        %v2260 = vmax.f32 %v2259, 0.0
        %v2261 = vpack.c.bf16 %v2260, %v2260
        %v2262 = vld [vmem:[%s10] sm:$0xf]
        %v2263 = vld [vmem:[%s10 + $0x4] sm:$0xf]
        %v2264 = vld [vmem:[%s10 + $0x8] sm:$0xf]
        %v2265 = vld [vmem:[%s10 + $0xc] sm:$0xf]
        %v2266 = vld [vmem:[%s10 + $0x10] sm:$0xf]
        %v2267 = vld [vmem:[%s10 + $0x14] sm:$0xf]
        %v2268 = vld [vmem:[%s10 + $0x18] sm:$0xf]
        %v2269 = vld [vmem:[%s10 + $0x1c] sm:$0xf]
        %v2270 = vld [vmem:[%s10 + $0x20] sm:$0xf]
        %v2271 = vld [vmem:[%s10 + $0x24] sm:$0xf]
        %v2272 = vld [vmem:[%s10 + $0x28] sm:$0xf]
        %v2273 = vld [vmem:[%s10 + $0x2c] sm:$0xf]
        %v2274 = vld [vmem:[%s10 + $0x30] sm:$0xf]
        %v2275 = vld [vmem:[%s10 + $0x34] sm:$0xf]
        %v2276 = vld [vmem:[%s10 + $0x38] sm:$0xf]
        %v2277 = vld [vmem:[%s10 + $0x3c] sm:$0xf]
        %v2294 = vunpack.c.l.b16 %v2262
        %v2295 = vunpack.c.l.b16 %v2263
        %v2296 = vunpack.c.l.b16 %v2264
        %v2297 = vunpack.c.l.b16 %v2265
        %v2298 = vunpack.c.l.b16 %v2266
        %v2299 = vunpack.c.l.b16 %v2267
        %v2300 = vunpack.c.l.b16 %v2268
        %v2301 = vunpack.c.l.b16 %v2269
        %v2302 = vunpack.c.l.b16 %v2270
        %v2303 = vunpack.c.l.b16 %v2271
        %v2304 = vunpack.c.l.b16 %v2272
        %v2305 = vunpack.c.l.b16 %v2273
        %v2306 = vunpack.c.l.b16 %v2274
        %v2307 = vunpack.c.l.b16 %v2275
        %v2308 = vunpack.c.l.b16 %v2276
        %v2309 = vunpack.c.l.b16 %v2277
        %v2310 = vpack.c.b16 %v2295, %v2294
        %v2311 = vpack.c.b16 %v2297, %v2296
        %v2312 = vpack.c.b16 %v2299, %v2298
        %v2313 = vpack.c.b16 %v2301, %v2300
        %v2314 = vpack.c.b16 %v2303, %v2302
        %v2315 = vpack.c.b16 %v2305, %v2304
        %v2316 = vpack.c.b16 %v2307, %v2306
        %v2317 = vpack.c.b16 %v2309, %v2308
        %2326 = vmatprep.subr.bf16.mxu0 0
        %2327 = vmatpush1.bf16.msra.mxu0 %v2310
        %2328 = vmatprep.subr.bf16.mxu0 0
        %2329 = vmatpush1.bf16.msra.mxu0 %v2311
        %2330 = vmatprep.subr.bf16.mxu0 0
        %2331 = vmatpush1.bf16.msra.mxu0 %v2312
        %2332 = vmatprep.subr.bf16.mxu0 0
        %2333 = vmatpush1.bf16.msra.mxu0 %v2313
        %2334 = vmatprep.subr.bf16.mxu0 0
        %2335 = vmatpush1.bf16.msra.mxu0 %v2314
        %2336 = vmatprep.subr.bf16.mxu0 0
        %2337 = vmatpush1.bf16.msra.mxu0 %v2315
        %2338 = vmatprep.subr.bf16.mxu0 0
        %2339 = vmatpush1.bf16.msra.mxu0 %v2316
        %2340 = vmatprep.subr.bf16.mxu0 0
        %2341 = vmatpush1.bf16.msra.mxu0 %v2317
        %2342 = vmatprep.subr.bf16.mxu0 0
        %2343 = vmatpush1.bf16.msra.mxu0 0
        %2344 = vmatprep.subr.bf16.mxu0 0
        %2345 = vmatpush1.bf16.msra.mxu0 0
        %2346 = vmatprep.subr.bf16.mxu0 0
        %2347 = vmatpush1.bf16.msra.mxu0 0
        %2348 = vmatprep.subr.bf16.mxu0 0
        %2349 = vmatpush1.bf16.msra.mxu0 0
        %2350 = vmatprep.subr.bf16.mxu0 0
        %2351 = vmatpush1.bf16.msra.mxu0 0
        %2352 = vmatprep.subr.bf16.mxu0 0
        %2353 = vmatpush1.bf16.msra.mxu0 0
        %2354 = vmatprep.subr.bf16.mxu0 0
        %2355 = vmatpush1.bf16.msra.mxu0 0
        %2356 = vmatprep.subr.bf16.mxu0 0
        %2357 = vmatpush1.bf16.msra.mxu0 0
        %2358 = vmatprep.mubr.bf16.mxu0 0
        %2359 = vmatmul.mubr.bf16.gmra.mrb[0].mxu0 %v2261
        %v2360 = vpop.f32.mrb[0].mxu0
        %v2361 = vadd.f32 0.0, %v2360
        %v2362 = vpop.f32.mrb[0].mxu0
        %v2363 = vpop.f32.mrb[0].mxu0
        %v2364 = vpop.f32.mrb[0].mxu0
        %2365 = vdwg.mxu0
        %v2366 = vadd.f32 %v2361, 0.0
        %s2367 = scalar_lea.vmem %s10, 64
        %v2368 = vld [vmem:[%s2367] sm:$0xf]
        %v2369 = vld [vmem:[%s2367 + $0x4] sm:$0xf]
        %v2370 = vld [vmem:[%s2367 + $0x8] sm:$0xf]
        %v2371 = vld [vmem:[%s2367 + $0xc] sm:$0xf]
        %v2372 = vld [vmem:[%s2367 + $0x10] sm:$0xf]
        %v2373 = vld [vmem:[%s2367 + $0x14] sm:$0xf]
        %v2374 = vld [vmem:[%s2367 + $0x18] sm:$0xf]
        %v2375 = vld [vmem:[%s2367 + $0x1c] sm:$0xf]
        %v2376 = vld [vmem:[%s2367 + $0x20] sm:$0xf]
        %v2377 = vld [vmem:[%s2367 + $0x24] sm:$0xf]
        %v2378 = vld [vmem:[%s2367 + $0x28] sm:$0xf]
        %v2379 = vld [vmem:[%s2367 + $0x2c] sm:$0xf]
        %v2380 = vld [vmem:[%s2367 + $0x30] sm:$0xf]
        %v2381 = vld [vmem:[%s2367 + $0x34] sm:$0xf]
        %v2382 = vld [vmem:[%s2367 + $0x38] sm:$0xf]
        %v2383 = vld [vmem:[%s2367 + $0x3c] sm:$0xf]
        %v2400 = vunpack.c.l.b16 %v2368
        %v2401 = vunpack.c.l.b16 %v2369
        %v2402 = vunpack.c.l.b16 %v2370
        %v2403 = vunpack.c.l.b16 %v2371
        %v2404 = vunpack.c.l.b16 %v2372
        %v2405 = vunpack.c.l.b16 %v2373
        %v2406 = vunpack.c.l.b16 %v2374
        %v2407 = vunpack.c.l.b16 %v2375
        %v2408 = vunpack.c.l.b16 %v2376
        %v2409 = vunpack.c.l.b16 %v2377
        %v2410 = vunpack.c.l.b16 %v2378
        %v2411 = vunpack.c.l.b16 %v2379
        %v2412 = vunpack.c.l.b16 %v2380
        %v2413 = vunpack.c.l.b16 %v2381
        %v2414 = vunpack.c.l.b16 %v2382
        %v2415 = vunpack.c.l.b16 %v2383
        %v2416 = vpack.c.b16 %v2401, %v2400
        %v2417 = vpack.c.b16 %v2403, %v2402
        %v2418 = vpack.c.b16 %v2405, %v2404
        %v2419 = vpack.c.b16 %v2407, %v2406
        %v2420 = vpack.c.b16 %v2409, %v2408
        %v2421 = vpack.c.b16 %v2411, %v2410
        %v2422 = vpack.c.b16 %v2413, %v2412
        %v2423 = vpack.c.b16 %v2415, %v2414
        %2432 = vmatprep.subr.bf16.mxu0 0
        %2433 = vmatpush1.bf16.msra.mxu0 %v2416
        %2434 = vmatprep.subr.bf16.mxu0 0
        %2435 = vmatpush1.bf16.msra.mxu0 %v2417
        %2436 = vmatprep.subr.bf16.mxu0 0
        %2437 = vmatpush1.bf16.msra.mxu0 %v2418
        %2438 = vmatprep.subr.bf16.mxu0 0
        %2439 = vmatpush1.bf16.msra.mxu0 %v2419
        %2440 = vmatprep.subr.bf16.mxu0 0
        %2441 = vmatpush1.bf16.msra.mxu0 %v2420
        %2442 = vmatprep.subr.bf16.mxu0 0
        %2443 = vmatpush1.bf16.msra.mxu0 %v2421
        %2444 = vmatprep.subr.bf16.mxu0 0
        %2445 = vmatpush1.bf16.msra.mxu0 %v2422
        %2446 = vmatprep.subr.bf16.mxu0 0
        %2447 = vmatpush1.bf16.msra.mxu0 %v2423
        %2448 = vmatprep.subr.bf16.mxu0 0
        %2449 = vmatpush1.bf16.msra.mxu0 0
        %2450 = vmatprep.subr.bf16.mxu0 0
        %2451 = vmatpush1.bf16.msra.mxu0 0
        %2452 = vmatprep.subr.bf16.mxu0 0
        %2453 = vmatpush1.bf16.msra.mxu0 0
        %2454 = vmatprep.subr.bf16.mxu0 0
        %2455 = vmatpush1.bf16.msra.mxu0 0
        %2456 = vmatprep.subr.bf16.mxu0 0
        %2457 = vmatpush1.bf16.msra.mxu0 0
        %2458 = vmatprep.subr.bf16.mxu0 0
        %2459 = vmatpush1.bf16.msra.mxu0 0
        %2460 = vmatprep.subr.bf16.mxu0 0
        %2461 = vmatpush1.bf16.msra.mxu0 0
        %2462 = vmatprep.subr.bf16.mxu0 0
        %2463 = vmatpush1.bf16.msra.mxu0 0
        %2464 = vmatprep.mubr.bf16.mxu0 0
        %2465 = vmatmul.mubr.bf16.gmra.mrb[0].mxu0 %v2261
        %v2466 = vpop.f32.mrb[0].mxu0
        %v2467 = vadd.f32 0.0, %v2466
        %v2468 = vpop.f32.mrb[0].mxu0
        %v2469 = vpop.f32.mrb[0].mxu0
        %v2470 = vpop.f32.mrb[0].mxu0
        %2471 = vdwg.mxu0
        %v2473 = vrot.slane %v2467, 1
        %v2475 = vadd.f32 %v2366, %v2473
        %s2476 = scalar_lea.vmem %s10, 128
        %v2477 = vld [vmem:[%s2476] sm:$0xf]
        %v2478 = vld [vmem:[%s2476 + $0x4] sm:$0xf]
        %v2479 = vld [vmem:[%s2476 + $0x8] sm:$0xf]
        %v2480 = vld [vmem:[%s2476 + $0xc] sm:$0xf]
        %v2481 = vld [vmem:[%s2476 + $0x10] sm:$0xf]
        %v2482 = vld [vmem:[%s2476 + $0x14] sm:$0xf]
        %v2483 = vld [vmem:[%s2476 + $0x18] sm:$0xf]
        %v2484 = vld [vmem:[%s2476 + $0x1c] sm:$0xf]
        %v2485 = vld [vmem:[%s2476 + $0x20] sm:$0xf]
        %v2486 = vld [vmem:[%s2476 + $0x24] sm:$0xf]
        %v2487 = vld [vmem:[%s2476 + $0x28] sm:$0xf]
        %v2488 = vld [vmem:[%s2476 + $0x2c] sm:$0xf]
        %v2489 = vld [vmem:[%s2476 + $0x30] sm:$0xf]
        %v2490 = vld [vmem:[%s2476 + $0x34] sm:$0xf]
        %v2491 = vld [vmem:[%s2476 + $0x38] sm:$0xf]
        %v2492 = vld [vmem:[%s2476 + $0x3c] sm:$0xf]
        %v2509 = vunpack.c.l.b16 %v2477
        %v2510 = vunpack.c.l.b16 %v2478
        %v2511 = vunpack.c.l.b16 %v2479
        %v2512 = vunpack.c.l.b16 %v2480
        %v2513 = vunpack.c.l.b16 %v2481
        %v2514 = vunpack.c.l.b16 %v2482
        %v2515 = vunpack.c.l.b16 %v2483
        %v2516 = vunpack.c.l.b16 %v2484
        %v2517 = vunpack.c.l.b16 %v2485
        %v2518 = vunpack.c.l.b16 %v2486
        %v2519 = vunpack.c.l.b16 %v2487
        %v2520 = vunpack.c.l.b16 %v2488
        %v2521 = vunpack.c.l.b16 %v2489
        %v2522 = vunpack.c.l.b16 %v2490
        %v2523 = vunpack.c.l.b16 %v2491
        %v2524 = vunpack.c.l.b16 %v2492
        %v2525 = vpack.c.b16 %v2510, %v2509
        %v2526 = vpack.c.b16 %v2512, %v2511
        %v2527 = vpack.c.b16 %v2514, %v2513
        %v2528 = vpack.c.b16 %v2516, %v2515
        %v2529 = vpack.c.b16 %v2518, %v2517
        %v2530 = vpack.c.b16 %v2520, %v2519
        %v2531 = vpack.c.b16 %v2522, %v2521
        %v2532 = vpack.c.b16 %v2524, %v2523
        %2541 = vmatprep.subr.bf16.mxu0 0
        %2542 = vmatpush1.bf16.msra.mxu0 %v2525
        %2543 = vmatprep.subr.bf16.mxu0 0
        %2544 = vmatpush1.bf16.msra.mxu0 %v2526
        %2545 = vmatprep.subr.bf16.mxu0 0
        %2546 = vmatpush1.bf16.msra.mxu0 %v2527
        %2547 = vmatprep.subr.bf16.mxu0 0
        %2548 = vmatpush1.bf16.msra.mxu0 %v2528
        %2549 = vmatprep.subr.bf16.mxu0 0
        %2550 = vmatpush1.bf16.msra.mxu0 %v2529
        %2551 = vmatprep.subr.bf16.mxu0 0
        %2552 = vmatpush1.bf16.msra.mxu0 %v2530
        %2553 = vmatprep.subr.bf16.mxu0 0
        %2554 = vmatpush1.bf16.msra.mxu0 %v2531
        %2555 = vmatprep.subr.bf16.mxu0 0
        %2556 = vmatpush1.bf16.msra.mxu0 %v2532
        %2557 = vmatprep.subr.bf16.mxu0 0
        %2558 = vmatpush1.bf16.msra.mxu0 0
        %2559 = vmatprep.subr.bf16.mxu0 0
        %2560 = vmatpush1.bf16.msra.mxu0 0
        %2561 = vmatprep.subr.bf16.mxu0 0
        %2562 = vmatpush1.bf16.msra.mxu0 0
        %2563 = vmatprep.subr.bf16.mxu0 0
        %2564 = vmatpush1.bf16.msra.mxu0 0
        %2565 = vmatprep.subr.bf16.mxu0 0
        %2566 = vmatpush1.bf16.msra.mxu0 0
        %2567 = vmatprep.subr.bf16.mxu0 0
        %2568 = vmatpush1.bf16.msra.mxu0 0
        %2569 = vmatprep.subr.bf16.mxu0 0
        %2570 = vmatpush1.bf16.msra.mxu0 0
        %2571 = vmatprep.subr.bf16.mxu0 0
        %2572 = vmatpush1.bf16.msra.mxu0 0
        %2573 = vmatprep.mubr.bf16.mxu0 0
        %2574 = vmatmul.mubr.bf16.gmra.mrb[0].mxu0 %v2261
        %v2575 = vpop.f32.mrb[0].mxu0
        %v2576 = vadd.f32 0.0, %v2575
        %v2577 = vpop.f32.mrb[0].mxu0
        %v2578 = vpop.f32.mrb[0].mxu0
        %v2579 = vpop.f32.mrb[0].mxu0
        %2580 = vdwg.mxu0
        %v2582 = vrot.slane %v2576, 2
        %v2584 = vadd.f32 %v2475, %v2582
        %s2585 = scalar_lea.vmem %s10, 192
        %v2586 = vld [vmem:[%s2585] sm:$0xf]
        %v2587 = vld [vmem:[%s2585 + $0x4] sm:$0xf]
        %v2588 = vld [vmem:[%s2585 + $0x8] sm:$0xf]
        %v2589 = vld [vmem:[%s2585 + $0xc] sm:$0xf]
        %v2590 = vld [vmem:[%s2585 + $0x10] sm:$0xf]
        %v2591 = vld [vmem:[%s2585 + $0x14] sm:$0xf]
        %v2592 = vld [vmem:[%s2585 + $0x18] sm:$0xf]
        %v2593 = vld [vmem:[%s2585 + $0x1c] sm:$0xf]
        %v2594 = vld [vmem:[%s2585 + $0x20] sm:$0xf]
        %v2595 = vld [vmem:[%s2585 + $0x24] sm:$0xf]
        %v2596 = vld [vmem:[%s2585 + $0x28] sm:$0xf]
        %v2597 = vld [vmem:[%s2585 + $0x2c] sm:$0xf]
        %v2598 = vld [vmem:[%s2585 + $0x30] sm:$0xf]
        %v2599 = vld [vmem:[%s2585 + $0x34] sm:$0xf]
        %v2600 = vld [vmem:[%s2585 + $0x38] sm:$0xf]
        %v2601 = vld [vmem:[%s2585 + $0x3c] sm:$0xf]
        %v2618 = vunpack.c.l.b16 %v2586
        %v2619 = vunpack.c.l.b16 %v2587
        %v2620 = vunpack.c.l.b16 %v2588
        %v2621 = vunpack.c.l.b16 %v2589
        %v2622 = vunpack.c.l.b16 %v2590
        %v2623 = vunpack.c.l.b16 %v2591
        %v2624 = vunpack.c.l.b16 %v2592
        %v2625 = vunpack.c.l.b16 %v2593
        %v2626 = vunpack.c.l.b16 %v2594
        %v2627 = vunpack.c.l.b16 %v2595
        %v2628 = vunpack.c.l.b16 %v2596
        %v2629 = vunpack.c.l.b16 %v2597
        %v2630 = vunpack.c.l.b16 %v2598
        %v2631 = vunpack.c.l.b16 %v2599
        %v2632 = vunpack.c.l.b16 %v2600
        %v2633 = vunpack.c.l.b16 %v2601
        %v2634 = vpack.c.b16 %v2619, %v2618
        %v2635 = vpack.c.b16 %v2621, %v2620
        %v2636 = vpack.c.b16 %v2623, %v2622
        %v2637 = vpack.c.b16 %v2625, %v2624
        %v2638 = vpack.c.b16 %v2627, %v2626
        %v2639 = vpack.c.b16 %v2629, %v2628
        %v2640 = vpack.c.b16 %v2631, %v2630
        %v2641 = vpack.c.b16 %v2633, %v2632
        %2650 = vmatprep.subr.bf16.mxu0 0
        %2651 = vmatpush1.bf16.msra.mxu0 %v2634
        %2652 = vmatprep.subr.bf16.mxu0 0
        %2653 = vmatpush1.bf16.msra.mxu0 %v2635
        %2654 = vmatprep.subr.bf16.mxu0 0
        %2655 = vmatpush1.bf16.msra.mxu0 %v2636
        %2656 = vmatprep.subr.bf16.mxu0 0
        %2657 = vmatpush1.bf16.msra.mxu0 %v2637
        %2658 = vmatprep.subr.bf16.mxu0 0
        %2659 = vmatpush1.bf16.msra.mxu0 %v2638
        %2660 = vmatprep.subr.bf16.mxu0 0
        %2661 = vmatpush1.bf16.msra.mxu0 %v2639
        %2662 = vmatprep.subr.bf16.mxu0 0
        %2663 = vmatpush1.bf16.msra.mxu0 %v2640
        %2664 = vmatprep.subr.bf16.mxu0 0
        %2665 = vmatpush1.bf16.msra.mxu0 %v2641
        %2666 = vmatprep.subr.bf16.mxu0 0
        %2667 = vmatpush1.bf16.msra.mxu0 0
        %2668 = vmatprep.subr.bf16.mxu0 0
        %2669 = vmatpush1.bf16.msra.mxu0 0
        %2670 = vmatprep.subr.bf16.mxu0 0
        %2671 = vmatpush1.bf16.msra.mxu0 0
        %2672 = vmatprep.subr.bf16.mxu0 0
        %2673 = vmatpush1.bf16.msra.mxu0 0
        %2674 = vmatprep.subr.bf16.mxu0 0
        %2675 = vmatpush1.bf16.msra.mxu0 0
        %2676 = vmatprep.subr.bf16.mxu0 0
        %2677 = vmatpush1.bf16.msra.mxu0 0
        %2678 = vmatprep.subr.bf16.mxu0 0
        %2679 = vmatpush1.bf16.msra.mxu0 0
        %2680 = vmatprep.subr.bf16.mxu0 0
        %2681 = vmatpush1.bf16.msra.mxu0 0
        %2682 = vmatprep.mubr.bf16.mxu0 0
        %2683 = vmatmul.mubr.bf16.gmra.mrb[0].mxu0 %v2261
        %v2684 = vpop.f32.mrb[0].mxu0
        %v2685 = vadd.f32 0.0, %v2684
        %v2686 = vpop.f32.mrb[0].mxu0
        %v2687 = vpop.f32.mrb[0].mxu0
        %v2688 = vpop.f32.mrb[0].mxu0
        %2689 = vdwg.mxu0
        %v2691 = vrot.slane %v2685, 3
        %v2693 = vadd.f32 %v2584, %v2691
        %v2694 = vld [vmem:[%s11] sm:$0x1]
        %v2695 = vadd.f32 %v2693, %v2694
        %vm2696 = vcmask 122880
        %2697 = vst.msk [vmem:[%s405] sm:$0x1] %vm2696, %v2695
        %s2698 = sand.u32 %s291, 1
        %s2699 = scalar_lea.sflag [#allocation3], %s2698
        %s2700 = sand.u32 %s291, 1
        %s2701 = scalar_lea.vmem [#allocation2], %s2700
        // Predicated region
        $region69: #{encoder_forward.1} parent=67 // pred_check
          %p2702 = pneg %p301
        $region70: #{encoder_forward.1} parent=67 // pred_check_branch
          %2704 = sbr.rel (%p2702) target = $region72
        $region71: #{encoder_forward.1} parent=67 // pred_region
          %s2706 = ssub.s32 16, 16
          %2707 = vsyncadd %s2699, %s2706
          %s2708 = smul.addr %s26, 16
          %s2709 = scalar_lea.hbm %s12, %s2708
          %s2711 = sshll.u32 %s2701, 4
          %s2712 = int_to_ptr.vmem [resolvable:$true] %s2711
          %2714 = dma.vmem_to_hbm [thread:$0]  %s2712, 16, %s2709, %s2699
        $region72: #{encoder_forward.1} parent=67 // pred_fallthru
          _
      $region68: #{encoder_forward.1} parent=5 // pred_fallthru
        _
      %p2715 = scmp.le.s32.totalorder 2, %s21
      // Predicated region
      $region73: #{encoder_forward.1} parent=5 // pred_check
        %p2716 = pneg %p2715
      $region74: #{encoder_forward.1} parent=5 // pred_check_branch
        %2718 = sbr.rel (%p2716) target = $region76
      $region75: #{encoder_forward.1} parent=5 // pred_region
        %s2719 = ssub.s32 %s21, 2
        // Predicated region
        $region77: #{encoder_forward.1} parent=75 // pred_check
          %p2720 = pneg %p307
        $region78: #{encoder_forward.1} parent=75 // pred_check_branch
          %2722 = sbr.rel (%p2720) target = $region80
        $region79: #{encoder_forward.1} parent=75 // pred_region
          %s2723 = sand.u32 %s292, 1
          %s2724 = scalar_lea.sflag [#allocation3], %s2723
          %s2725 = sand.u32 %s292, 1
          %s2726 = scalar_lea.vmem [#allocation2], %s2725
          %2727 = dma.done %s2724, 16
        $region80: #{encoder_forward.1} parent=75 // pred_fallthru
          _
      $region76: #{encoder_forward.1} parent=5 // pred_fallthru
        _
    $region6: #{encoder_forward.1} parent=1 // loop_footer
      %s25 = sadd.s32 1, %s21
    $region7: #{encoder_forward.1} parent=1 // loop_footer_branch
      %20 = sbr.rel target = $region3
    $region8: #{encoder_forward.1} parent=1 // loop_exit
      _
    %2728 = vsyncpa [#allocation3], 1
    %s2729 = scalar_lea.sflag [#allocation3], 1
    %2730 = vsyncpa %s2729, 1

</llo_original>
